<compile_context>
chip_gen: v7x
topology: tpu7x:2x2x1
jax: 0.10.0
libtpu: 0.0.40
codegen_flags: <defaults>
</compile_context>

<pallas_src>
import functools

import jax
import jax.numpy as jnp
from jax.experimental import pallas as pl
from jax.experimental.pallas import tpu as pltpu

C1, C2, HIDDEN, NUM_JOINTS, NUM_VIEWS = 8, 16, 32, 21, 3


# ---------------------------------------------------------------------------
# Fused kernel: conv1 -> conv2 -> GAP -> MLP head, all in vregs (no scratch)
# ---------------------------------------------------------------------------
def _fused_forward_kernel(N, V, H, W,
                          x_ref, b1w_ref, b1_ref, b2w_ref, b2_ref,
                          pw_ref, bf1_ref, wf2_ref, bf2_ref, o_ref):
    """Whole forward in a single grid step.

    Lane-dense layouts (x padding is encoded in the banded weights b1w/b2w,
    y padding is realized via roll + iota mask):
      x_ref : (V*N*H, W)       view-major input slab, row = (v*N + n)*H + y
      h1    : (V*N*H, W*C1)    conv1 output, col = x*C1 + c   (128 lanes)
      h2    : (V*N*H, W*C2)    conv2 output, col = x*C2 + c   (256 lanes)
    """
    f32 = jnp.float32
    VNH = V * N * H

    x = x_ref[...]                                           # (VNH, W)

    # row-within-image index, used to zero the dy=±1 taps at image boundaries
    ymod = jax.lax.broadcasted_iota(jnp.int32, (VNH, 1), 0) % H
    top = ymod == 0
    bot = ymod == (H - 1)

    def shift_up(a):     # row r <- a[r-1], zero pad at top of each image
        return jnp.where(top, 0.0, pltpu.roll(a, 1, axis=0))

    def shift_dn(a):     # row r <- a[r+1], zero pad at bottom of each image
        return jnp.where(bot, 0.0, pltpu.roll(a, a.shape[0] - 1, axis=0))

    # --- conv1 (3x3, Cin=1 -> C1) + bias + ReLU: 3 banded matmuls over dy ---
    acc1 = jnp.dot(shift_up(x), b1w_ref[0], preferred_element_type=f32)
    acc1 = acc1 + jnp.dot(x, b1w_ref[1], preferred_element_type=f32)
    acc1 = acc1 + jnp.dot(shift_dn(x), b1w_ref[2], preferred_element_type=f32)
    h1 = jnp.maximum(acc1 + b1_ref[...], 0.0)                # (VNH, W*C1)

    # --- conv2 (3x3, C1 -> C2) + bias + ReLU ---------------------------------
    acc2 = jnp.dot(shift_up(h1), b2w_ref[0], preferred_element_type=f32)
    acc2 = acc2 + jnp.dot(h1, b2w_ref[1], preferred_element_type=f32)
    acc2 = acc2 + jnp.dot(shift_dn(h1), b2w_ref[2], preferred_element_type=f32)
    h2 = jnp.maximum(acc2 + b2_ref[...], 0.0)                # (VNH, W*C2)

    # --- GAP over y (sublane reduce); GAP-over-x + fc1 fused into pw ---------
    s = h2.reshape(V * N, H, h2.shape[1]).sum(axis=1)        # (V*N, W*C2)

    # --- MLP head; per-sample view-concat folded into the fused fc1 dots -----
    hfc = bf1_ref[...]                                       # (1, hid) -> bcast
    for v in range(V):
        hfc = hfc + jnp.dot(s[v * N:(v + 1) * N, :], pw_ref[v],
                            preferred_element_type=f32)
    hfc = jnp.maximum(hfc, 0.0)                              # (N, hid)
    o_ref[...] = (jnp.dot(hfc, wf2_ref[...],
                          preferred_element_type=f32) + bf2_ref[...])


# ---------------------------------------------------------------------------
# One-time weight preprocessing (done at param-load time, NOT per call)
# ---------------------------------------------------------------------------
def _band_conv_weights(w_taps, width):
    """(9, Cin, Cout) 3x3 taps -> (3, width*Cin, width*Cout) banded matrices.

    For each dy, B_dy[(x+dx-1)*Cin + ci, x*Cout + co] = w[3*dy+dx, ci, co],
    with out-of-range x+dx-1 dropped (this encodes the x-direction zero pad).
    """
    mats = []
    for dy in range(3):
        m = jnp.zeros((width * w_taps.shape[1], width * w_taps.shape[2]),
                      jnp.float32)
        for dx in range(3):
            shift = jnp.eye(width, width, k=1 - dx, dtype=jnp.float32)
            m = m + jnp.kron(shift, w_taps[3 * dy + dx])
        mats.append(m)
    return jnp.stack(mats)


def prepare_params(params, H, W):
    """Precompute kernel-ready weights once (a few hundred KB, cached)."""
    c2 = params["w2"].shape[2]
    wf1 = params["wf1"]
    V = wf1.shape[0] // c2
    # GAP x-average (/(H*W)) fused into fc1: pw[v] = pool @ wf1_v
    #   = tile(wf1_v over x) / (H*W), shape (W*C2, HIDDEN) per view.
    pw = jnp.stack([jnp.tile(wf1[v * c2:(v + 1) * c2, :], (W, 1)) / float(H * W)
                    for v in range(V)])
    return dict(
        b1w=_band_conv_weights(params["w1"], W),     # (3, W,      W*C1)
        b1=jnp.tile(params["b1"], (1, W)),           # (1, W*C1)
        b2w=_band_conv_weights(params["w2"], W),     # (3, W*C1,   W*C2)
        b2=jnp.tile(params["b2"], (1, W)),           # (1, W*C2)
        pw=pw,                                       # (V, W*C2,   HIDDEN)
        bf1=params["bf1"],                           # (1, HIDDEN)
        wf2=params["wf2"],                           # (HIDDEN, 63)
        bf2=params["bf2"],                           # (1, 63)
    )


# ---------------------------------------------------------------------------
# Model (glue) + deterministic parameters
# ---------------------------------------------------------------------------
def init_params():
    key = jax.random.PRNGKey(42)
    k = jax.random.split(key, 6)
    fc_in = NUM_VIEWS * C2
    return dict(
        w1=jax.random.normal(k[0], (9, 1, C1), jnp.float32) * 0.30,
        b1=jnp.zeros((1, C1), jnp.float32),
        w2=jax.random.normal(k[1], (9, C1, C2), jnp.float32) * 0.10,
        b2=jnp.zeros((1, C2), jnp.float32),
        wf1=jax.random.normal(k[2], (fc_in, HIDDEN), jnp.float32) * 0.10,
        bf1=jnp.zeros((1, HIDDEN), jnp.float32),
        wf2=jax.random.normal(k[3], (HIDDEN, NUM_JOINTS * 3), jnp.float32) * 0.10,
        bf2=jnp.zeros((1, NUM_JOINTS * 3), jnp.float32),
    )


@jax.jit
def multiview_hand_pose_cnn(depth_map, prep):
    """depth_map: float32 [N, V, H, W] (V = 3 multi-view depth maps).

    `prep` must come from prepare_params() (computed once, reused per call).
    Returns float32 [N, NUM_JOINTS * 3] joint coordinate regression.
    """
    N, V, H, W = depth_map.shape
    wc1 = prep["b1w"].shape[2]
    wc2 = prep["b2w"].shape[2]
    hid = prep["wf2"].shape[0]
    out_dim = prep["wf2"].shape[1]

    # View-major lane-dense slab: row = (v*N + n)*H + y (cheap layout plumbing)
    x_slab = depth_map.transpose(1, 0, 2, 3).reshape(V * N * H, W)

    kernel = functools.partial(_fused_forward_kernel, N, V, H, W)

    return pl.pallas_call(
        kernel,
        out_shape=jax.ShapeDtypeStruct((N, out_dim), jnp.float32),
        grid=(1,),
        in_specs=[
            pl.BlockSpec((V * N * H, W), lambda i: (0, 0)),
            pl.BlockSpec((3, W, wc1), lambda i: (0, 0, 0)),
            pl.BlockSpec((1, wc1), lambda i: (0, 0)),
            pl.BlockSpec((3, wc1, wc2), lambda i: (0, 0, 0)),
            pl.BlockSpec((1, wc2), lambda i: (0, 0)),
            pl.BlockSpec((V, wc2, hid), lambda i: (0, 0, 0)),
            pl.BlockSpec((1, hid), lambda i: (0, 0)),
            pl.BlockSpec((hid, out_dim), lambda i: (0, 0)),
            pl.BlockSpec((1, out_dim), lambda i: (0, 0)),
        ],
        out_specs=pl.BlockSpec((N, out_dim), lambda i: (0, 0)),
        compiler_params=pltpu.CompilerParams(
            dimension_semantics=("arbitrary",)),
    )(x_slab, prep["b1w"], prep["b1"], prep["b2w"], prep["b2"],
      prep["pw"], prep["bf1"], prep["wf2"], prep["bf2"])


if __name__ == "__main__":
    N, V, H, W = 2, NUM_VIEWS, 16, 16
    depth_map = jax.random.uniform(jax.random.PRNGKey(0), (N, V, H, W),
                                   dtype=jnp.float32)
    params = init_params()
    prep = jax.block_until_ready(prepare_params(params, H, W))  # once, cached
    out = multiview_hand_pose_cnn(depth_map, prep)
    out = jax.block_until_ready(out)
    assert out.shape == (N, NUM_JOINTS * 3) and out.dtype == jnp.float32
    assert bool(jnp.all(jnp.isfinite(out)))
    print("KERNEL_OK")
</pallas_src>

<mosaic_0001>
module attributes {stable_mosaic.version = 11 : i64} {
  func.func @_fused_forward_kernel(%arg0: i32, %arg1: memref<96x16xf32, #tpu.memory_space<vmem>>, %arg2: memref<3x16x128xf32, #tpu.memory_space<vmem>>, %arg3: memref<1x128xf32, #tpu.memory_space<vmem>>, %arg4: memref<3x128x256xf32, #tpu.memory_space<vmem>>, %arg5: memref<1x256xf32, #tpu.memory_space<vmem>>, %arg6: memref<3x256x32xf32, #tpu.memory_space<vmem>>, %arg7: memref<1x32xf32, #tpu.memory_space<vmem>>, %arg8: memref<32x63xf32, #tpu.memory_space<vmem>>, %arg9: memref<1x63xf32, #tpu.memory_space<vmem>>, %arg10: memref<2x63xf32, #tpu.memory_space<vmem>>) attributes {dimension_semantics = [#tpu.dimension_semantics<arbitrary>], iteration_bounds = array<i64: 1>, scalar_prefetch = 0 : i64, scratch_operands = 0 : i64, tpu.core_type = #tpu.core_type<tc>, window_params = [{pipeline_mode = #tpu.pipeline_mode<synchronous>, transform_indices = @transform_0, window_bounds = array<i64: 96, 16>}, {pipeline_mode = #tpu.pipeline_mode<synchronous>, transform_indices = @transform_1, window_bounds = array<i64: 3, 16, 128>}, {pipeline_mode = #tpu.pipeline_mode<synchronous>, transform_indices = @transform_2, window_bounds = array<i64: 1, 128>}, {pipeline_mode = #tpu.pipeline_mode<synchronous>, transform_indices = @transform_3, window_bounds = array<i64: 3, 128, 256>}, {pipeline_mode = #tpu.pipeline_mode<synchronous>, transform_indices = @transform_4, window_bounds = array<i64: 1, 256>}, {pipeline_mode = #tpu.pipeline_mode<synchronous>, transform_indices = @transform_5, window_bounds = array<i64: 3, 256, 32>}, {pipeline_mode = #tpu.pipeline_mode<synchronous>, transform_indices = @transform_6, window_bounds = array<i64: 1, 32>}, {pipeline_mode = #tpu.pipeline_mode<synchronous>, transform_indices = @transform_7, window_bounds = array<i64: 32, 63>}, {pipeline_mode = #tpu.pipeline_mode<synchronous>, transform_indices = @transform_8, window_bounds = array<i64: 1, 63>}, {pipeline_mode = #tpu.pipeline_mode<synchronous>, transform_indices = @transform_9, window_bounds = array<i64: 2, 63>}]} {
    %c0 = arith.constant 0 : index
    %c0_0 = arith.constant 0 : index
    %0 = vector.load %arg1[%c0, %c0_0] : memref<96x16xf32, #tpu.memory_space<vmem>>, vector<96x16xf32>
    %1 = tpu.iota {dimensions = array<i32: 0>} : vector<96x1xi32>
    %c16_i32 = arith.constant 16 : i32
    %c0_i32 = arith.constant 0 : i32
    %2 = arith.cmpi eq, %c16_i32, %c0_i32 : i32
    %c1_i32 = arith.constant 1 : i32
    %3 = arith.select %2, %c1_i32, %c16_i32 : i32
    %4 = vector.broadcast %3 : i32 to vector<96x1xi32>
    %5 = arith.remsi %1, %4 : vector<96x1xi32>
    %c0_i32_1 = arith.constant 0 : i32
    %6 = vector.broadcast %c0_i32_1 : i32 to vector<96x1xi32>
    %7 = arith.cmpi ne, %5, %6 : vector<96x1xi32>
    %c0_i32_2 = arith.constant 0 : i32
    %8 = vector.broadcast %c0_i32_2 : i32 to vector<96x1xi32>
    %9 = arith.cmpi slt, %5, %8 : vector<96x1xi32>
    %c0_i32_3 = arith.constant 0 : i32
    %10 = arith.cmpi slt, %3, %c0_i32_3 : i32
    %11 = vector.broadcast %10 : i1 to vector<96x1xi1>
    %12 = vector.broadcast %11 : vector<96x1xi1> to vector<96x1xi1>
    %13 = arith.xori %9, %12 : vector<96x1xi1>
    %14 = arith.andi %13, %7 : vector<96x1xi1>
    %15 = vector.broadcast %3 : i32 to vector<96x1xi32>
    %16 = arith.addi %5, %15 : vector<96x1xi32>
    %17 = arith.select %14, %16, %5 : vector<96x1xi1>, vector<96x1xi32>
    %c0_i32_4 = arith.constant 0 : i32
    %18 = vector.broadcast %c0_i32_4 : i32 to vector<96x1xi32>
    %19 = arith.cmpi eq, %17, %18 : vector<96x1xi32>
    %c15_i32 = arith.constant 15 : i32
    %20 = vector.broadcast %c15_i32 : i32 to vector<96x1xi32>
    %21 = arith.cmpi eq, %17, %20 : vector<96x1xi32>
    %c1_i32_5 = arith.constant 1 : i32
    %22 = tpu.dynamic_rotate %0 by %c1_i32_5 dim 0 : vector<96x16xf32>, i32 -> vector<96x16xf32>
    %cst = arith.constant 0.000000e+00 : f32
    %23 = vector.shape_cast %19 : vector<96x1xi1> to vector<96x1xi1>
    %24 = vector.broadcast %23 : vector<96x1xi1> to vector<96x16xi1>
    %25 = vector.broadcast %cst : f32 to vector<96x16xf32>
    %26 = arith.select %24, %25, %22 : vector<96x16xi1>, vector<96x16xf32>
    %c0_6 = arith.constant 0 : index
    %c0_7 = arith.constant 0 : index
    %c0_8 = arith.constant 0 : index
    %27 = vector.load %arg2[%c0_6, %c0_7, %c0_8] : memref<3x16x128xf32, #tpu.memory_space<vmem>>, vector<1x16x128xf32>
    %28 = vector.shape_cast %27 : vector<1x16x128xf32> to vector<16x128xf32>
    %cst_9 = arith.constant dense<0.000000e+00> : vector<96x128xf32>
    %29 = tpu.matmul %26, %28, %cst_9 {dimension_numbers = #tpu.dot_dimension_numbers<[1], [0], [0], [1], [0, 0, 1, 1], [], []>} : vector<96x16xf32>, vector<16x128xf32>, vector<96x128xf32> -> vector<96x128xf32>
    %c1 = arith.constant 1 : index
    %c0_10 = arith.constant 0 : index
    %c0_11 = arith.constant 0 : index
    %30 = vector.load %arg2[%c1, %c0_10, %c0_11] : memref<3x16x128xf32, #tpu.memory_space<vmem>>, vector<1x16x128xf32>
    %31 = vector.shape_cast %30 : vector<1x16x128xf32> to vector<16x128xf32>
    %cst_12 = arith.constant dense<0.000000e+00> : vector<96x128xf32>
    %32 = tpu.matmul %0, %31, %cst_12 {dimension_numbers = #tpu.dot_dimension_numbers<[1], [0], [0], [1], [0, 0, 1, 1], [], []>} : vector<96x16xf32>, vector<16x128xf32>, vector<96x128xf32> -> vector<96x128xf32>
    %33 = arith.addf %29, %32 : vector<96x128xf32>
    %c95_i32 = arith.constant 95 : i32
    %34 = tpu.dynamic_rotate %0 by %c95_i32 dim 0 : vector<96x16xf32>, i32 -> vector<96x16xf32>
    %cst_13 = arith.constant 0.000000e+00 : f32
    %35 = vector.shape_cast %21 : vector<96x1xi1> to vector<96x1xi1>
    %36 = vector.broadcast %35 : vector<96x1xi1> to vector<96x16xi1>
    %37 = vector.broadcast %cst_13 : f32 to vector<96x16xf32>
    %38 = arith.select %36, %37, %34 : vector<96x16xi1>, vector<96x16xf32>
    %c2 = arith.constant 2 : index
    %c0_14 = arith.constant 0 : index
    %c0_15 = arith.constant 0 : index
    %39 = vector.load %arg2[%c2, %c0_14, %c0_15] : memref<3x16x128xf32, #tpu.memory_space<vmem>>, vector<1x16x128xf32>
    %40 = vector.shape_cast %39 : vector<1x16x128xf32> to vector<16x128xf32>
    %cst_16 = arith.constant dense<0.000000e+00> : vector<96x128xf32>
    %41 = tpu.matmul %38, %40, %cst_16 {dimension_numbers = #tpu.dot_dimension_numbers<[1], [0], [0], [1], [0, 0, 1, 1], [], []>} : vector<96x16xf32>, vector<16x128xf32>, vector<96x128xf32> -> vector<96x128xf32>
    %42 = arith.addf %33, %41 : vector<96x128xf32>
    %c0_17 = arith.constant 0 : index
    %c0_18 = arith.constant 0 : index
    %43 = vector.load %arg3[%c0_17, %c0_18] : memref<1x128xf32, #tpu.memory_space<vmem>>, vector<1x128xf32>
    %44 = vector.broadcast %43 : vector<1x128xf32> to vector<96x128xf32>
    %45 = arith.addf %42, %44 : vector<96x128xf32>
    %cst_19 = arith.constant 0.000000e+00 : f32
    %46 = vector.broadcast %cst_19 : f32 to vector<96x128xf32>
    %47 = arith.maximumf %45, %46 : vector<96x128xf32>
    %c1_i32_20 = arith.constant 1 : i32
    %48 = tpu.dynamic_rotate %47 by %c1_i32_20 dim 0 : vector<96x128xf32>, i32 -> vector<96x128xf32>
    %cst_21 = arith.constant 0.000000e+00 : f32
    %49 = vector.shape_cast %19 : vector<96x1xi1> to vector<96x1xi1>
    %50 = vector.broadcast %49 : vector<96x1xi1> to vector<96x128xi1>
    %51 = vector.broadcast %cst_21 : f32 to vector<96x128xf32>
    %52 = arith.select %50, %51, %48 : vector<96x128xi1>, vector<96x128xf32>
    %c0_22 = arith.constant 0 : index
    %c0_23 = arith.constant 0 : index
    %c0_24 = arith.constant 0 : index
    %53 = vector.load %arg4[%c0_22, %c0_23, %c0_24] : memref<3x128x256xf32, #tpu.memory_space<vmem>>, vector<1x128x256xf32>
    %54 = vector.shape_cast %53 : vector<1x128x256xf32> to vector<128x256xf32>
    %cst_25 = arith.constant dense<0.000000e+00> : vector<96x256xf32>
    %55 = tpu.matmul %52, %54, %cst_25 {dimension_numbers = #tpu.dot_dimension_numbers<[1], [0], [0], [1], [0, 0, 1, 1], [], []>} : vector<96x128xf32>, vector<128x256xf32>, vector<96x256xf32> -> vector<96x256xf32>
    %c1_26 = arith.constant 1 : index
    %c0_27 = arith.constant 0 : index
    %c0_28 = arith.constant 0 : index
    %56 = vector.load %arg4[%c1_26, %c0_27, %c0_28] : memref<3x128x256xf32, #tpu.memory_space<vmem>>, vector<1x128x256xf32>
    %57 = vector.shape_cast %56 : vector<1x128x256xf32> to vector<128x256xf32>
    %cst_29 = arith.constant dense<0.000000e+00> : vector<96x256xf32>
    %58 = tpu.matmul %47, %57, %cst_29 {dimension_numbers = #tpu.dot_dimension_numbers<[1], [0], [0], [1], [0, 0, 1, 1], [], []>} : vector<96x128xf32>, vector<128x256xf32>, vector<96x256xf32> -> vector<96x256xf32>
    %59 = arith.addf %55, %58 : vector<96x256xf32>
    %c95_i32_30 = arith.constant 95 : i32
    %60 = tpu.dynamic_rotate %47 by %c95_i32_30 dim 0 : vector<96x128xf32>, i32 -> vector<96x128xf32>
    %cst_31 = arith.constant 0.000000e+00 : f32
    %61 = vector.shape_cast %21 : vector<96x1xi1> to vector<96x1xi1>
    %62 = vector.broadcast %61 : vector<96x1xi1> to vector<96x128xi1>
    %63 = vector.broadcast %cst_31 : f32 to vector<96x128xf32>
    %64 = arith.select %62, %63, %60 : vector<96x128xi1>, vector<96x128xf32>
    %c2_32 = arith.constant 2 : index
    %c0_33 = arith.constant 0 : index
    %c0_34 = arith.constant 0 : index
    %65 = vector.load %arg4[%c2_32, %c0_33, %c0_34] : memref<3x128x256xf32, #tpu.memory_space<vmem>>, vector<1x128x256xf32>
    %66 = vector.shape_cast %65 : vector<1x128x256xf32> to vector<128x256xf32>
    %cst_35 = arith.constant dense<0.000000e+00> : vector<96x256xf32>
    %67 = tpu.matmul %64, %66, %cst_35 {dimension_numbers = #tpu.dot_dimension_numbers<[1], [0], [0], [1], [0, 0, 1, 1], [], []>} : vector<96x128xf32>, vector<128x256xf32>, vector<96x256xf32> -> vector<96x256xf32>
    %68 = arith.addf %59, %67 : vector<96x256xf32>
    %c0_36 = arith.constant 0 : index
    %c0_37 = arith.constant 0 : index
    %69 = vector.load %arg5[%c0_36, %c0_37] : memref<1x256xf32, #tpu.memory_space<vmem>>, vector<1x256xf32>
    %70 = vector.broadcast %69 : vector<1x256xf32> to vector<96x256xf32>
    %71 = arith.addf %68, %70 : vector<96x256xf32>
    %cst_38 = arith.constant 0.000000e+00 : f32
    %72 = vector.broadcast %cst_38 : f32 to vector<96x256xf32>
    %73 = arith.maximumf %71, %72 : vector<96x256xf32>
    %74 = vector.shape_cast %73 : vector<96x256xf32> to vector<6x16x256xf32>
    %cst_39 = arith.constant dense<0.000000e+00> : vector<6x256xf32>
    %75 = vector.multi_reduction <add>, %74, %cst_39 [1] : vector<6x16x256xf32> to vector<6x256xf32>
    %c0_40 = arith.constant 0 : index
    %c0_41 = arith.constant 0 : index
    %76 = vector.load %arg7[%c0_40, %c0_41] : memref<1x32xf32, #tpu.memory_space<vmem>>, vector<1x32xf32>
    %77 = vector.extract_strided_slice %75 {offsets = [0, 0], sizes = [2, 256], strides = [1, 1]} : vector<6x256xf32> to vector<2x256xf32>
    %c0_42 = arith.constant 0 : index
    %c0_43 = arith.constant 0 : index
    %c0_44 = arith.constant 0 : index
    %78 = vector.load %arg6[%c0_42, %c0_43, %c0_44] : memref<3x256x32xf32, #tpu.memory_space<vmem>>, vector<1x256x32xf32>
    %79 = vector.shape_cast %78 : vector<1x256x32xf32> to vector<256x32xf32>
    %cst_45 = arith.constant dense<0.000000e+00> : vector<2x32xf32>
    %80 = tpu.matmul %77, %79, %cst_45 {dimension_numbers = #tpu.dot_dimension_numbers<[1], [0], [0], [1], [0, 0, 1, 1], [], []>} : vector<2x256xf32>, vector<256x32xf32>, vector<2x32xf32> -> vector<2x32xf32>
    %81 = vector.broadcast %76 : vector<1x32xf32> to vector<2x32xf32>
    %82 = arith.addf %81, %80 : vector<2x32xf32>
    %83 = vector.extract_strided_slice %75 {offsets = [2, 0], sizes = [2, 256], strides = [1, 1]} : vector<6x256xf32> to vector<2x256xf32>
    %c1_46 = arith.constant 1 : index
    %c0_47 = arith.constant 0 : index
    %c0_48 = arith.constant 0 : index
    %84 = vector.load %arg6[%c1_46, %c0_47, %c0_48] : memref<3x256x32xf32, #tpu.memory_space<vmem>>, vector<1x256x32xf32>
    %85 = vector.shape_cast %84 : vector<1x256x32xf32> to vector<256x32xf32>
    %cst_49 = arith.constant dense<0.000000e+00> : vector<2x32xf32>
    %86 = tpu.matmul %83, %85, %cst_49 {dimension_numbers = #tpu.dot_dimension_numbers<[1], [0], [0], [1], [0, 0, 1, 1], [], []>} : vector<2x256xf32>, vector<256x32xf32>, vector<2x32xf32> -> vector<2x32xf32>
    %87 = arith.addf %82, %86 : vector<2x32xf32>
    %88 = vector.extract_strided_slice %75 {offsets = [4, 0], sizes = [2, 256], strides = [1, 1]} : vector<6x256xf32> to vector<2x256xf32>
    %c2_50 = arith.constant 2 : index
    %c0_51 = arith.constant 0 : index
    %c0_52 = arith.constant 0 : index
    %89 = vector.load %arg6[%c2_50, %c0_51, %c0_52] : memref<3x256x32xf32, #tpu.memory_space<vmem>>, vector<1x256x32xf32>
    %90 = vector.shape_cast %89 : vector<1x256x32xf32> to vector<256x32xf32>
    %cst_53 = arith.constant dense<0.000000e+00> : vector<2x32xf32>
    %91 = tpu.matmul %88, %90, %cst_53 {dimension_numbers = #tpu.dot_dimension_numbers<[1], [0], [0], [1], [0, 0, 1, 1], [], []>} : vector<2x256xf32>, vector<256x32xf32>, vector<2x32xf32> -> vector<2x32xf32>
    %92 = arith.addf %87, %91 : vector<2x32xf32>
    %cst_54 = arith.constant 0.000000e+00 : f32
    %93 = vector.broadcast %cst_54 : f32 to vector<2x32xf32>
    %94 = arith.maximumf %92, %93 : vector<2x32xf32>
    %c0_55 = arith.constant 0 : index
    %c0_56 = arith.constant 0 : index
    %95 = vector.load %arg8[%c0_55, %c0_56] : memref<32x63xf32, #tpu.memory_space<vmem>>, vector<32x63xf32>
    %cst_57 = arith.constant dense<0.000000e+00> : vector<2x63xf32>
    %96 = tpu.matmul %94, %95, %cst_57 {dimension_numbers = #tpu.dot_dimension_numbers<[1], [0], [0], [1], [0, 0, 1, 1], [], []>} : vector<2x32xf32>, vector<32x63xf32>, vector<2x63xf32> -> vector<2x63xf32>
    %c0_58 = arith.constant 0 : index
    %c0_59 = arith.constant 0 : index
    %97 = vector.load %arg9[%c0_58, %c0_59] : memref<1x63xf32, #tpu.memory_space<vmem>>, vector<1x63xf32>
    %98 = vector.broadcast %97 : vector<1x63xf32> to vector<2x63xf32>
    %99 = arith.addf %96, %98 : vector<2x63xf32>
    %c0_60 = arith.constant 0 : index
    %c0_61 = arith.constant 0 : index
    %100 = vector.load %arg10[%c0_60, %c0_61] : memref<2x63xf32, #tpu.memory_space<vmem>>, vector<2x63xf32>
    tpu.vector_store %arg10[%c0_60, %c0_61], %99 {strides = array<i32>} : memref<2x63xf32, #tpu.memory_space<vmem>>, vector<2x63xf32>,
    return
  }
  func.func @transform_0(%arg0: i32) -> (i32, i32) {
    %c0_i32 = arith.constant 0 : i32
    %c0_i32_0 = arith.constant 0 : i32
    %c0_i32_1 = arith.constant 0 : i32
    return %c0_i32, %c0_i32_0 : i32, i32
  }
  func.func @transform_1(%arg0: i32) -> (i32, i32, i32) {
    %c0_i32 = arith.constant 0 : i32
    %c0_i32_0 = arith.constant 0 : i32
    %c0_i32_1 = arith.constant 0 : i32
    %c0_i32_2 = arith.constant 0 : i32
    return %c0_i32, %c0_i32_0, %c0_i32_1 : i32, i32, i32
  }
  func.func @transform_2(%arg0: i32) -> (i32, i32) {
    %c0_i32 = arith.constant 0 : i32
    %c0_i32_0 = arith.constant 0 : i32
    %c0_i32_1 = arith.constant 0 : i32
    return %c0_i32, %c0_i32_0 : i32, i32
  }
  func.func @transform_3(%arg0: i32) -> (i32, i32, i32) {
    %c0_i32 = arith.constant 0 : i32
    %c0_i32_0 = arith.constant 0 : i32
    %c0_i32_1 = arith.constant 0 : i32
    %c0_i32_2 = arith.constant 0 : i32
    return %c0_i32, %c0_i32_0, %c0_i32_1 : i32, i32, i32
  }
  func.func @transform_4(%arg0: i32) -> (i32, i32) {
    %c0_i32 = arith.constant 0 : i32
    %c0_i32_0 = arith.constant 0 : i32
    %c0_i32_1 = arith.constant 0 : i32
    return %c0_i32, %c0_i32_0 : i32, i32
  }
  func.func @transform_5(%arg0: i32) -> (i32, i32, i32) {
    %c0_i32 = arith.constant 0 : i32
    %c0_i32_0 = arith.constant 0 : i32
    %c0_i32_1 = arith.constant 0 : i32
    %c0_i32_2 = arith.constant 0 : i32
    return %c0_i32, %c0_i32_0, %c0_i32_1 : i32, i32, i32
  }
  func.func @transform_6(%arg0: i32) -> (i32, i32) {
    %c0_i32 = arith.constant 0 : i32
    %c0_i32_0 = arith.constant 0 : i32
    %c0_i32_1 = arith.constant 0 : i32
    return %c0_i32, %c0_i32_0 : i32, i32
  }
  func.func @transform_7(%arg0: i32) -> (i32, i32) {
    %c0_i32 = arith.constant 0 : i32
    %c0_i32_0 = arith.constant 0 : i32
    %c0_i32_1 = arith.constant 0 : i32
    return %c0_i32, %c0_i32_0 : i32, i32
  }
  func.func @transform_8(%arg0: i32) -> (i32, i32) {
    %c0_i32 = arith.constant 0 : i32
    %c0_i32_0 = arith.constant 0 : i32
    %c0_i32_1 = arith.constant 0 : i32
    return %c0_i32, %c0_i32_0 : i32, i32
  }
  func.func @transform_9(%arg0: i32) -> (i32, i32) {
    %c0_i32 = arith.constant 0 : i32
    %c0_i32_0 = arith.constant 0 : i32
    %c0_i32_1 = arith.constant 0 : i32
    return %c0_i32, %c0_i32_0 : i32, i32
  }
}

</mosaic_0001>

<llo_original>
// kernel: multiview_hand_pose_cnn.1
$region0: #{multiview_hand_pose_cnn.1}
  #allocation0 [shape = 'u32[]', space=smem, size = 0x4, offset = 0x4, fixed_abs, tag = 'smem constant byte address 0x4 - core index']
  #allocation1 [shape = 'u32[144,128]{1,0:T(1,128)}', space=vmem, size = 0x12000, scoped, tag = 'internal scratch']
  %s0 = inlined_call_operand.vmem [shape: f32[96,16], index: 0, kind: input, shape index: {}]
  %s1 = inlined_call_operand.vmem [shape: f32[3,16,128], index: 1, kind: input, shape index: {}]
  %s2 = inlined_call_operand.vmem [shape: f32[1,128], index: 2, kind: input, shape index: {}]
  %s3 = inlined_call_operand.vmem [shape: f32[3,128,256], index: 3, kind: input, shape index: {}]
  %s4 = inlined_call_operand.vmem [shape: f32[1,256], index: 4, kind: input, shape index: {}]
  %s5 = inlined_call_operand.vmem [shape: f32[3,256,32], index: 5, kind: input, shape index: {}]
  %s6 = inlined_call_operand.vmem [shape: f32[1,32], index: 6, kind: input, shape index: {}]
  %s7 = inlined_call_operand.vmem [shape: f32[32,63], index: 7, kind: input, shape index: {}]
  %s8 = inlined_call_operand.vmem [shape: f32[1,63], index: 8, kind: input, shape index: {}]
  %s9 = inlined_call_operand.hbm [shape: f32[2,63], index: 9, kind: output, shape index: {}]
  %s10 = sld [smem:[#allocation0]]
  $region46: #{multiview_hand_pose_cnn.1} parent=0
    _
  %s12 = ssub.s32 1, %s10
  %s13 = scalar_select 0, %s12, %s10
  $region1: #{multiview_hand_pose_cnn.1} parent=0
    #allocation2 [shape = 'u8[1024]{0}', space=vmem, size = 0x400, scoped, tag = 'output window, operand 0, single buffered']
    #allocation3 [shape = 's32[1]{0}', space=sflag, size = 0x4, scoped, tag = 'scoped memory for multiview_hand_pose_cnn.1']
    %14 = vsyncpa [#allocation3], 0
    // Predicated region
    $region2: #{multiview_hand_pose_cnn.1} parent=1 // pred_check
      _
    $region3: #{multiview_hand_pose_cnn.1} parent=1 // pred_check_branch
      %16 = sbr.rel (0) target = $region5
    $region4: #{multiview_hand_pose_cnn.1} parent=1 // pred_region
      _
    $region5: #{multiview_hand_pose_cnn.1} parent=1 // pred_fallthru
      _
    // Predicated region
    $region6: #{multiview_hand_pose_cnn.1} parent=1 // pred_check
      _
    $region7: #{multiview_hand_pose_cnn.1} parent=1 // pred_check_branch
      %18 = sbr.rel (0) target = $region9
    $region8: #{multiview_hand_pose_cnn.1} parent=1 // pred_region
      _
    $region9: #{multiview_hand_pose_cnn.1} parent=1 // pred_fallthru
      _
    // Predicated region
    $region10: #{multiview_hand_pose_cnn.1} parent=1 // pred_check
      _
    $region11: #{multiview_hand_pose_cnn.1} parent=1 // pred_check_branch
      %20 = sbr.rel (0) target = $region13
    $region12: #{multiview_hand_pose_cnn.1} parent=1 // pred_region
      _
    $region13: #{multiview_hand_pose_cnn.1} parent=1 // pred_fallthru
      _
    // Predicated region
    $region14: #{multiview_hand_pose_cnn.1} parent=1 // pred_check
      _
    $region15: #{multiview_hand_pose_cnn.1} parent=1 // pred_check_branch
      %22 = sbr.rel (0) target = $region17
    $region16: #{multiview_hand_pose_cnn.1} parent=1 // pred_region
      _
    $region17: #{multiview_hand_pose_cnn.1} parent=1 // pred_fallthru
      _
    // Predicated region
    $region18: #{multiview_hand_pose_cnn.1} parent=1 // pred_check
      _
    $region19: #{multiview_hand_pose_cnn.1} parent=1 // pred_check_branch
      %24 = sbr.rel (0) target = $region21
    $region20: #{multiview_hand_pose_cnn.1} parent=1 // pred_region
      _
    $region21: #{multiview_hand_pose_cnn.1} parent=1 // pred_fallthru
      _
    // Predicated region
    $region22: #{multiview_hand_pose_cnn.1} parent=1 // pred_check
      _
    $region23: #{multiview_hand_pose_cnn.1} parent=1 // pred_check_branch
      %26 = sbr.rel (0) target = $region25
    $region24: #{multiview_hand_pose_cnn.1} parent=1 // pred_region
      _
    $region25: #{multiview_hand_pose_cnn.1} parent=1 // pred_fallthru
      _
    // Predicated region
    $region26: #{multiview_hand_pose_cnn.1} parent=1 // pred_check
      _
    $region27: #{multiview_hand_pose_cnn.1} parent=1 // pred_check_branch
      %28 = sbr.rel (0) target = $region29
    $region28: #{multiview_hand_pose_cnn.1} parent=1 // pred_region
      _
    $region29: #{multiview_hand_pose_cnn.1} parent=1 // pred_fallthru
      _
    // Predicated region
    $region30: #{multiview_hand_pose_cnn.1} parent=1 // pred_check
      _
    $region31: #{multiview_hand_pose_cnn.1} parent=1 // pred_check_branch
      %30 = sbr.rel (0) target = $region33
    $region32: #{multiview_hand_pose_cnn.1} parent=1 // pred_region
      _
    $region33: #{multiview_hand_pose_cnn.1} parent=1 // pred_fallthru
      _
    // Predicated region
    $region34: #{multiview_hand_pose_cnn.1} parent=1 // pred_check
      _
    $region35: #{multiview_hand_pose_cnn.1} parent=1 // pred_check_branch
      %32 = sbr.rel (0) target = $region37
    $region36: #{multiview_hand_pose_cnn.1} parent=1 // pred_region
      _
    $region37: #{multiview_hand_pose_cnn.1} parent=1 // pred_fallthru
      _
    %v33 = vld [vmem:[%s0] sm:$0xff]
    %v34 = vld [vmem:[%s0 + $0x8] sm:$0xff]
    %v35 = vld [vmem:[%s0 + $0x10] sm:$0xff]
    %v36 = vld [vmem:[%s0 + $0x18] sm:$0xff]
    %v37 = vld [vmem:[%s0 + $0x20] sm:$0xff]
    %v38 = vld [vmem:[%s0 + $0x28] sm:$0xff]
    %v39 = vld [vmem:[%s0 + $0x30] sm:$0xff]
    %v40 = vld [vmem:[%s0 + $0x38] sm:$0xff]
    %v41 = vld [vmem:[%s0 + $0x40] sm:$0xff]
    %v42 = vld [vmem:[%s0 + $0x48] sm:$0xff]
    %v43 = vld [vmem:[%s0 + $0x50] sm:$0xff]
    %v44 = vld [vmem:[%s0 + $0x58] sm:$0xff]
    %v45 = vlaneseq
    %v46 = vshrl.u32 %v45, 7
    %v47 = vadd.s32 %v46, 8
    %v48 = vadd.s32 %v46, 16
    %v49 = vadd.s32 %v46, 24
    %v50 = vadd.s32 %v46, 32
    %v51 = vadd.s32 %v46, 40
    %v52 = vadd.s32 %v46, 48
    %v53 = vadd.s32 %v46, 56
    %v54 = vadd.s32 %v46, 64
    %v55 = vadd.s32 %v46, 72
    %v56 = vadd.s32 %v46, 80
    %v57 = vadd.s32 %v46, 88
    %vm58 = vcmp.lt.s32.totalorder %v46, 0
    %v59 = vsub.s32 0, %v46
    %v60 = vsel %vm58, %v59, %v46
    %v61 = vshrl.u32 %v60, 4
    %v62 = vand.u32 %v60, 15
    %v63 = vsub.s32 0, %v62
    %v64 = vsel %vm58, %v63, %v62
    %vm65 = vcmp.lt.s32.totalorder %v47, 0
    %v66 = vsub.s32 0, %v47
    %v67 = vsel %vm65, %v66, %v47
    %v68 = vshrl.u32 %v67, 4
    %v69 = vand.u32 %v67, 15
    %v70 = vsub.s32 0, %v69
    %v71 = vsel %vm65, %v70, %v69
    %vm72 = vcmp.lt.s32.totalorder %v48, 0
    %v73 = vsub.s32 0, %v48
    %v74 = vsel %vm72, %v73, %v48
    %v75 = vshrl.u32 %v74, 4
    %v76 = vand.u32 %v74, 15
    %v77 = vsub.s32 0, %v76
    %v78 = vsel %vm72, %v77, %v76
    %vm79 = vcmp.lt.s32.totalorder %v49, 0
    %v80 = vsub.s32 0, %v49
    %v81 = vsel %vm79, %v80, %v49
    %v82 = vshrl.u32 %v81, 4
    %v83 = vand.u32 %v81, 15
    %v84 = vsub.s32 0, %v83
    %v85 = vsel %vm79, %v84, %v83
    %vm86 = vcmp.lt.s32.totalorder %v50, 0
    %v87 = vsub.s32 0, %v50
    %v88 = vsel %vm86, %v87, %v50
    %v89 = vshrl.u32 %v88, 4
    %v90 = vand.u32 %v88, 15
    %v91 = vsub.s32 0, %v90
    %v92 = vsel %vm86, %v91, %v90
    %vm93 = vcmp.lt.s32.totalorder %v51, 0
    %v94 = vsub.s32 0, %v51
    %v95 = vsel %vm93, %v94, %v51
    %v96 = vshrl.u32 %v95, 4
    %v97 = vand.u32 %v95, 15
    %v98 = vsub.s32 0, %v97
    %v99 = vsel %vm93, %v98, %v97
    %vm100 = vcmp.lt.s32.totalorder %v52, 0
    %v101 = vsub.s32 0, %v52
    %v102 = vsel %vm100, %v101, %v52
    %v103 = vshrl.u32 %v102, 4
    %v104 = vand.u32 %v102, 15
    %v105 = vsub.s32 0, %v104
    %v106 = vsel %vm100, %v105, %v104
    %vm107 = vcmp.lt.s32.totalorder %v53, 0
    %v108 = vsub.s32 0, %v53
    %v109 = vsel %vm107, %v108, %v53
    %v110 = vshrl.u32 %v109, 4
    %v111 = vand.u32 %v109, 15
    %v112 = vsub.s32 0, %v111
    %v113 = vsel %vm107, %v112, %v111
    %vm114 = vcmp.lt.s32.totalorder %v54, 0
    %v115 = vsub.s32 0, %v54
    %v116 = vsel %vm114, %v115, %v54
    %v117 = vshrl.u32 %v116, 4
    %v118 = vand.u32 %v116, 15
    %v119 = vsub.s32 0, %v118
    %v120 = vsel %vm114, %v119, %v118
    %vm121 = vcmp.lt.s32.totalorder %v55, 0
    %v122 = vsub.s32 0, %v55
    %v123 = vsel %vm121, %v122, %v55
    %v124 = vshrl.u32 %v123, 4
    %v125 = vand.u32 %v123, 15
    %v126 = vsub.s32 0, %v125
    %v127 = vsel %vm121, %v126, %v125
    %vm128 = vcmp.lt.s32.totalorder %v56, 0
    %v129 = vsub.s32 0, %v56
    %v130 = vsel %vm128, %v129, %v56
    %v131 = vshrl.u32 %v130, 4
    %v132 = vand.u32 %v130, 15
    %v133 = vsub.s32 0, %v132
    %v134 = vsel %vm128, %v133, %v132
    %vm135 = vcmp.lt.s32.totalorder %v57, 0
    %v136 = vsub.s32 0, %v57
    %v137 = vsel %vm135, %v136, %v57
    %v138 = vshrl.u32 %v137, 4
    %v139 = vand.u32 %v137, 15
    %v140 = vsub.s32 0, %v139
    %v141 = vsel %vm135, %v140, %v139
    %vm142 = vcmp.ne.s32.totalorder %v64, 0
    %vm143 = vcmp.ne.s32.totalorder %v71, 0
    %vm144 = vcmp.ne.s32.totalorder %v78, 0
    %vm145 = vcmp.ne.s32.totalorder %v85, 0
    %vm146 = vcmp.ne.s32.totalorder %v92, 0
    %vm147 = vcmp.ne.s32.totalorder %v99, 0
    %vm148 = vcmp.ne.s32.totalorder %v106, 0
    %vm149 = vcmp.ne.s32.totalorder %v113, 0
    %vm150 = vcmp.ne.s32.totalorder %v120, 0
    %vm151 = vcmp.ne.s32.totalorder %v127, 0
    %vm152 = vcmp.ne.s32.totalorder %v134, 0
    %vm153 = vcmp.ne.s32.totalorder %v141, 0
    %vm154 = vcmp.lt.s32.totalorder %v64, 0
    %vm155 = vcmp.lt.s32.totalorder %v71, 0
    %vm156 = vcmp.lt.s32.totalorder %v78, 0
    %vm157 = vcmp.lt.s32.totalorder %v85, 0
    %vm158 = vcmp.lt.s32.totalorder %v92, 0
    %vm159 = vcmp.lt.s32.totalorder %v99, 0
    %vm160 = vcmp.lt.s32.totalorder %v106, 0
    %vm161 = vcmp.lt.s32.totalorder %v113, 0
    %vm162 = vcmp.lt.s32.totalorder %v120, 0
    %vm163 = vcmp.lt.s32.totalorder %v127, 0
    %vm164 = vcmp.lt.s32.totalorder %v134, 0
    %vm165 = vcmp.lt.s32.totalorder %v141, 0
    %vm166 = vmand %vm154, %vm142
    %vm167 = vmand %vm155, %vm143
    %vm168 = vmand %vm156, %vm144
    %vm169 = vmand %vm157, %vm145
    %vm170 = vmand %vm158, %vm146
    %vm171 = vmand %vm159, %vm147
    %vm172 = vmand %vm160, %vm148
    %vm173 = vmand %vm161, %vm149
    %vm174 = vmand %vm162, %vm150
    %vm175 = vmand %vm163, %vm151
    %vm176 = vmand %vm164, %vm152
    %vm177 = vmand %vm165, %vm153
    %v178 = vadd.s32 %v64, 16
    %v179 = vadd.s32 %v71, 16
    %v180 = vadd.s32 %v78, 16
    %v181 = vadd.s32 %v85, 16
    %v182 = vadd.s32 %v92, 16
    %v183 = vadd.s32 %v99, 16
    %v184 = vadd.s32 %v106, 16
    %v185 = vadd.s32 %v113, 16
    %v186 = vadd.s32 %v120, 16
    %v187 = vadd.s32 %v127, 16
    %v188 = vadd.s32 %v134, 16
    %v189 = vadd.s32 %v141, 16
    %v190 = vsel %vm166, %v178, %v64
    %v191 = vsel %vm167, %v179, %v71
    %v192 = vsel %vm168, %v180, %v78
    %v193 = vsel %vm169, %v181, %v85
    %v194 = vsel %vm170, %v182, %v92
    %v195 = vsel %vm171, %v183, %v99
    %v196 = vsel %vm172, %v184, %v106
    %v197 = vsel %vm173, %v185, %v113
    %v198 = vsel %vm174, %v186, %v120
    %v199 = vsel %vm175, %v187, %v127
    %v200 = vsel %vm176, %v188, %v134
    %v201 = vsel %vm177, %v189, %v141
    %vm202 = vcmp.eq.s32.totalorder %v190, 0
    %vm203 = vcmp.eq.s32.totalorder %v191, 0
    %vm204 = vcmp.eq.s32.totalorder %v192, 0
    %vm205 = vcmp.eq.s32.totalorder %v193, 0
    %vm206 = vcmp.eq.s32.totalorder %v194, 0
    %vm207 = vcmp.eq.s32.totalorder %v195, 0
    %vm208 = vcmp.eq.s32.totalorder %v196, 0
    %vm209 = vcmp.eq.s32.totalorder %v197, 0
    %vm210 = vcmp.eq.s32.totalorder %v198, 0
    %vm211 = vcmp.eq.s32.totalorder %v199, 0
    %vm212 = vcmp.eq.s32.totalorder %v200, 0
    %vm213 = vcmp.eq.s32.totalorder %v201, 0
    %vm214 = vcmp.eq.s32.totalorder %v190, 15
    %vm215 = vcmp.eq.s32.totalorder %v191, 15
    %vm216 = vcmp.eq.s32.totalorder %v192, 15
    %vm217 = vcmp.eq.s32.totalorder %v193, 15
    %vm218 = vcmp.eq.s32.totalorder %v194, 15
    %vm219 = vcmp.eq.s32.totalorder %v195, 15
    %vm220 = vcmp.eq.s32.totalorder %v196, 15
    %vm221 = vcmp.eq.s32.totalorder %v197, 15
    %vm222 = vcmp.eq.s32.totalorder %v198, 15
    %vm223 = vcmp.eq.s32.totalorder %v199, 15
    %vm224 = vcmp.eq.s32.totalorder %v200, 15
    %vm225 = vcmp.eq.s32.totalorder %v201, 15
    %v226 = vrot.slane %v33, 7
    %v227 = vrot.slane %v34, 7
    %v228 = vrot.slane %v35, 7
    %v229 = vrot.slane %v36, 7
    %v230 = vrot.slane %v37, 7
    %v231 = vrot.slane %v38, 7
    %v232 = vrot.slane %v39, 7
    %v233 = vrot.slane %v40, 7
    %v234 = vrot.slane %v41, 7
    %v235 = vrot.slane %v42, 7
    %v236 = vrot.slane %v43, 7
    %v237 = vrot.slane %v44, 7
    %vm238 = vcmp.lt.s32.totalorder %v46, 1
    %v239 = vsel %vm238, %v236, %v237
    %v240 = vsel %vm238, %v235, %v236
    %v241 = vsel %vm238, %v234, %v235
    %v242 = vsel %vm238, %v233, %v234
    %v243 = vsel %vm238, %v232, %v233
    %v244 = vsel %vm238, %v231, %v232
    %v245 = vsel %vm238, %v230, %v231
    %v246 = vsel %vm238, %v229, %v230
    %v247 = vsel %vm238, %v228, %v229
    %v248 = vsel %vm238, %v227, %v228
    %v249 = vsel %vm238, %v226, %v227
    %v250 = vsel %vm238, %v237, %v226
    %v251 = vsel %vm202, 1, 0
    %v252 = vsel %vm203, 1, 0
    %v253 = vsel %vm204, 1, 0
    %v254 = vsel %vm205, 1, 0
    %v255 = vsel %vm206, 1, 0
    %v256 = vsel %vm207, 1, 0
    %v257 = vsel %vm208, 1, 0
    %v258 = vsel %vm209, 1, 0
    %v259 = vsel %vm210, 1, 0
    %v260 = vsel %vm211, 1, 0
    %v261 = vsel %vm212, 1, 0
    %v262 = vsel %vm213, 1, 0
    %vm263 = vcmp.eq.s32.totalorder %v251, 1
    %vm264 = vcmp.eq.s32.totalorder %v252, 1
    %vm265 = vcmp.eq.s32.totalorder %v253, 1
    %vm266 = vcmp.eq.s32.totalorder %v254, 1
    %vm267 = vcmp.eq.s32.totalorder %v255, 1
    %vm268 = vcmp.eq.s32.totalorder %v256, 1
    %vm269 = vcmp.eq.s32.totalorder %v257, 1
    %vm270 = vcmp.eq.s32.totalorder %v258, 1
    %vm271 = vcmp.eq.s32.totalorder %v259, 1
    %vm272 = vcmp.eq.s32.totalorder %v260, 1
    %vm273 = vcmp.eq.s32.totalorder %v261, 1
    %vm274 = vcmp.eq.s32.totalorder %v262, 1
    %v275 = vsel %vm263, 0.0, %v250
    %v276 = vsel %vm264, 0.0, %v249
    %v277 = vsel %vm265, 0.0, %v248
    %v278 = vsel %vm266, 0.0, %v247
    %v279 = vsel %vm267, 0.0, %v246
    %v280 = vsel %vm268, 0.0, %v245
    %v281 = vsel %vm269, 0.0, %v244
    %v282 = vsel %vm270, 0.0, %v243
    %v283 = vsel %vm271, 0.0, %v242
    %v284 = vsel %vm272, 0.0, %v241
    %v285 = vsel %vm273, 0.0, %v240
    %v286 = vsel %vm274, 0.0, %v239
    %v287 = vld [vmem:[%s1] sm:$0xff]
    %v288 = vld [vmem:[%s1 + $0x8] sm:$0xff]
    %s289 = scalar_lea.vmem %s1, 16
    %v290 = vld [vmem:[%s289] sm:$0xff]
    %v291 = vld [vmem:[%s289 + $0x8] sm:$0xff]
    %vm292 = vcmask 130048
    %v294 = vsel %vm292, %v33, 0
    %v297 = vsel %vm292, %v34, 0
    %v300 = vsel %vm292, %v35, 0
    %v303 = vsel %vm292, %v36, 0
    %v306 = vsel %vm292, %v37, 0
    %v309 = vsel %vm292, %v38, 0
    %v312 = vsel %vm292, %v39, 0
    %v315 = vsel %vm292, %v40, 0
    %v318 = vsel %vm292, %v41, 0
    %v321 = vsel %vm292, %v42, 0
    %v324 = vsel %vm292, %v43, 0
    %v327 = vsel %vm292, %v44, 0
    %329 = vmatprep.subr.mxu0 0.0
    %330 = vmatpush1.msra.mxu0 %v290
    %331 = vmatprep.subr.mxu0 0.0
    %332 = vmatpush1.msra.mxu0 %v291
    %333 = vmatprep.subr.mxu0 0.0
    %334 = vmatpush1.msra.mxu0 0.0
    %335 = vmatprep.subr.mxu0 0.0
    %336 = vmatpush1.msra.mxu0 0.0
    %337 = vmatprep.subr.mxu0 0.0
    %338 = vmatpush1.msra.mxu0 0.0
    %339 = vmatprep.subr.mxu0 0.0
    %340 = vmatpush1.msra.mxu0 0.0
    %341 = vmatprep.subr.mxu0 0.0
    %342 = vmatpush1.msra.mxu0 0.0
    %343 = vmatprep.subr.mxu0 0.0
    %344 = vmatpush1.msra.mxu0 0.0
    %345 = vmatprep.subr.mxu0 0.0
    %346 = vmatpush1.msra.mxu0 0.0
    %347 = vmatprep.subr.mxu0 0.0
    %348 = vmatpush1.msra.mxu0 0.0
    %349 = vmatprep.subr.mxu0 0.0
    %350 = vmatpush1.msra.mxu0 0.0
    %351 = vmatprep.subr.mxu0 0.0
    %352 = vmatpush1.msra.mxu0 0.0
    %353 = vmatprep.subr.mxu0 0.0
    %354 = vmatpush1.msra.mxu0 0.0
    %355 = vmatprep.subr.mxu0 0.0
    %356 = vmatpush1.msra.mxu0 0.0
    %357 = vmatprep.subr.mxu0 0.0
    %358 = vmatpush1.msra.mxu0 0.0
    %359 = vmatprep.subr.mxu0 0.0
    %360 = vmatpush1.msra.mxu0 0.0
    %361 = vmatprep.subr.mxu0 0.0
    %362 = vmatpush1.msra.mxu0 0.0
    %363 = vmatprep.subr.mxu0 0.0
    %364 = vmatpush1.msra.mxu0 0.0
    %365 = vmatprep.subr.mxu0 0.0
    %366 = vmatpush1.msra.mxu0 0.0
    %367 = vmatprep.subr.mxu0 0.0
    %368 = vmatpush1.msra.mxu0 0.0
    %369 = vmatprep.subr.mxu0 0.0
    %370 = vmatpush1.msra.mxu0 0.0
    %371 = vmatprep.subr.mxu0 0.0
    %372 = vmatpush1.msra.mxu0 0.0
    %373 = vmatprep.subr.mxu0 0.0
    %374 = vmatpush1.msra.mxu0 0.0
    %375 = vmatprep.subr.mxu0 0.0
    %376 = vmatpush1.msra.mxu0 0.0
    %377 = vmatprep.subr.mxu0 0.0
    %378 = vmatpush1.msra.mxu0 0.0
    %379 = vmatprep.subr.mxu0 0.0
    %380 = vmatpush1.msra.mxu0 0.0
    %381 = vmatprep.subr.mxu0 0.0
    %382 = vmatpush1.msra.mxu0 0.0
    %383 = vmatprep.subr.mxu0 0.0
    %384 = vmatpush1.msra.mxu0 0.0
    %385 = vmatprep.subr.mxu0 0.0
    %386 = vmatpush1.msra.mxu0 0.0
    %387 = vmatprep.subr.mxu0 0.0
    %388 = vmatpush1.msra.mxu0 0.0
    %389 = vmatprep.subr.mxu0 0.0
    %390 = vmatpush1.msra.mxu0 0.0
    %391 = vmatprep.subr.mxu0 0.0
    %392 = vmatpush1.msra.mxu0 0.0
    %393 = vmatprep.mubr.f32.mxu0 0.0
    %394 = vmatmul.mubr.f32.gmra.mrb[0].mxu0 %v294
    %v395 = vpop.f32.mrb[0].mxu0
    %v396 = vadd.f32 0.0, %v395
    %v397 = vpop.f32.mrb[0].mxu0
    %398 = vmatprep.mubr.f32.mxu0 0.0
    %399 = vmatmul.mubr.f32.gmra.mrb[0].mxu0 %v297
    %v400 = vpop.f32.mrb[0].mxu0
    %v401 = vadd.f32 0.0, %v400
    %v402 = vpop.f32.mrb[0].mxu0
    %403 = vmatprep.mubr.f32.mxu0 0.0
    %404 = vmatmul.mubr.f32.gmra.mrb[0].mxu0 %v300
    %v405 = vpop.f32.mrb[0].mxu0
    %v406 = vadd.f32 0.0, %v405
    %v407 = vpop.f32.mrb[0].mxu0
    %408 = vmatprep.mubr.f32.mxu0 0.0
    %409 = vmatmul.mubr.f32.gmra.mrb[0].mxu0 %v303
    %v410 = vpop.f32.mrb[0].mxu0
    %v411 = vadd.f32 0.0, %v410
    %v412 = vpop.f32.mrb[0].mxu0
    %413 = vmatprep.mubr.f32.mxu0 0.0
    %414 = vmatmul.mubr.f32.gmra.mrb[0].mxu0 %v306
    %v415 = vpop.f32.mrb[0].mxu0
    %v416 = vadd.f32 0.0, %v415
    %v417 = vpop.f32.mrb[0].mxu0
    %418 = vmatprep.mubr.f32.mxu0 0.0
    %419 = vmatmul.mubr.f32.gmra.mrb[0].mxu0 %v309
    %v420 = vpop.f32.mrb[0].mxu0
    %v421 = vadd.f32 0.0, %v420
    %v422 = vpop.f32.mrb[0].mxu0
    %423 = vmatprep.mubr.f32.mxu0 0.0
    %424 = vmatmul.mubr.f32.gmra.mrb[0].mxu0 %v312
    %v425 = vpop.f32.mrb[0].mxu0
    %v426 = vadd.f32 0.0, %v425
    %v427 = vpop.f32.mrb[0].mxu0
    %428 = vmatprep.mubr.f32.mxu0 0.0
    %429 = vmatmul.mubr.f32.gmra.mrb[0].mxu0 %v315
    %v430 = vpop.f32.mrb[0].mxu0
    %v431 = vadd.f32 0.0, %v430
    %v432 = vpop.f32.mrb[0].mxu0
    %433 = vmatprep.mubr.f32.mxu0 0.0
    %434 = vmatmul.mubr.f32.gmra.mrb[0].mxu0 %v318
    %v435 = vpop.f32.mrb[0].mxu0
    %v436 = vadd.f32 0.0, %v435
    %v437 = vpop.f32.mrb[0].mxu0
    %438 = vmatprep.mubr.f32.mxu0 0.0
    %439 = vmatmul.mubr.f32.gmra.mrb[0].mxu0 %v321
    %v440 = vpop.f32.mrb[0].mxu0
    %v441 = vadd.f32 0.0, %v440
    %v442 = vpop.f32.mrb[0].mxu0
    %443 = vmatprep.mubr.f32.mxu0 0.0
    %444 = vmatmul.mubr.f32.gmra.mrb[0].mxu0 %v324
    %v445 = vpop.f32.mrb[0].mxu0
    %v446 = vadd.f32 0.0, %v445
    %v447 = vpop.f32.mrb[0].mxu0
    %448 = vmatprep.mubr.f32.mxu0 0.0
    %449 = vmatmul.mubr.f32.gmra.mrb[0].mxu0 %v327
    %v450 = vpop.f32.mrb[0].mxu0
    %v451 = vadd.f32 0.0, %v450
    %v452 = vpop.f32.mrb[0].mxu0
    %453 = vdwg.mxu0
    %v455 = vsel %vm292, %v275, 0
    %v458 = vsel %vm292, %v276, 0
    %v461 = vsel %vm292, %v277, 0
    %v464 = vsel %vm292, %v278, 0
    %v467 = vsel %vm292, %v279, 0
    %v470 = vsel %vm292, %v280, 0
    %v473 = vsel %vm292, %v281, 0
    %v476 = vsel %vm292, %v282, 0
    %v479 = vsel %vm292, %v283, 0
    %v482 = vsel %vm292, %v284, 0
    %v485 = vsel %vm292, %v285, 0
    %v488 = vsel %vm292, %v286, 0
    %490 = vmatprep.subr.mxu0 0.0
    %491 = vmatpush1.msra.mxu0 %v287
    %492 = vmatprep.subr.mxu0 0.0
    %493 = vmatpush1.msra.mxu0 %v288
    %494 = vmatprep.subr.mxu0 0.0
    %495 = vmatpush1.msra.mxu0 0.0
    %496 = vmatprep.subr.mxu0 0.0
    %497 = vmatpush1.msra.mxu0 0.0
    %498 = vmatprep.subr.mxu0 0.0
    %499 = vmatpush1.msra.mxu0 0.0
    %500 = vmatprep.subr.mxu0 0.0
    %501 = vmatpush1.msra.mxu0 0.0
    %502 = vmatprep.subr.mxu0 0.0
    %503 = vmatpush1.msra.mxu0 0.0
    %504 = vmatprep.subr.mxu0 0.0
    %505 = vmatpush1.msra.mxu0 0.0
    %506 = vmatprep.subr.mxu0 0.0
    %507 = vmatpush1.msra.mxu0 0.0
    %508 = vmatprep.subr.mxu0 0.0
    %509 = vmatpush1.msra.mxu0 0.0
    %510 = vmatprep.subr.mxu0 0.0
    %511 = vmatpush1.msra.mxu0 0.0
    %512 = vmatprep.subr.mxu0 0.0
    %513 = vmatpush1.msra.mxu0 0.0
    %514 = vmatprep.subr.mxu0 0.0
    %515 = vmatpush1.msra.mxu0 0.0
    %516 = vmatprep.subr.mxu0 0.0
    %517 = vmatpush1.msra.mxu0 0.0
    %518 = vmatprep.subr.mxu0 0.0
    %519 = vmatpush1.msra.mxu0 0.0
    %520 = vmatprep.subr.mxu0 0.0
    %521 = vmatpush1.msra.mxu0 0.0
    %522 = vmatprep.subr.mxu0 0.0
    %523 = vmatpush1.msra.mxu0 0.0
    %524 = vmatprep.subr.mxu0 0.0
    %525 = vmatpush1.msra.mxu0 0.0
    %526 = vmatprep.subr.mxu0 0.0
    %527 = vmatpush1.msra.mxu0 0.0
    %528 = vmatprep.subr.mxu0 0.0
    %529 = vmatpush1.msra.mxu0 0.0
    %530 = vmatprep.subr.mxu0 0.0
    %531 = vmatpush1.msra.mxu0 0.0
    %532 = vmatprep.subr.mxu0 0.0
    %533 = vmatpush1.msra.mxu0 0.0
    %534 = vmatprep.subr.mxu0 0.0
    %535 = vmatpush1.msra.mxu0 0.0
    %536 = vmatprep.subr.mxu0 0.0
    %537 = vmatpush1.msra.mxu0 0.0
    %538 = vmatprep.subr.mxu0 0.0
    %539 = vmatpush1.msra.mxu0 0.0
    %540 = vmatprep.subr.mxu0 0.0
    %541 = vmatpush1.msra.mxu0 0.0
    %542 = vmatprep.subr.mxu0 0.0
    %543 = vmatpush1.msra.mxu0 0.0
    %544 = vmatprep.subr.mxu0 0.0
    %545 = vmatpush1.msra.mxu0 0.0
    %546 = vmatprep.subr.mxu0 0.0
    %547 = vmatpush1.msra.mxu0 0.0
    %548 = vmatprep.subr.mxu0 0.0
    %549 = vmatpush1.msra.mxu0 0.0
    %550 = vmatprep.subr.mxu0 0.0
    %551 = vmatpush1.msra.mxu0 0.0
    %552 = vmatprep.subr.mxu0 0.0
    %553 = vmatpush1.msra.mxu0 0.0
    %554 = vmatprep.mubr.f32.mxu0 0.0
    %555 = vmatmul.mubr.f32.gmra.mrb[0].mxu0 %v455
    %v556 = vpop.f32.mrb[0].mxu0
    %v557 = vadd.f32 %v396, %v556
    %v558 = vpop.f32.mrb[0].mxu0
    %559 = vmatprep.mubr.f32.mxu0 0.0
    %560 = vmatmul.mubr.f32.gmra.mrb[0].mxu0 %v458
    %v561 = vpop.f32.mrb[0].mxu0
    %v562 = vadd.f32 %v401, %v561
    %v563 = vpop.f32.mrb[0].mxu0
    %564 = vmatprep.mubr.f32.mxu0 0.0
    %565 = vmatmul.mubr.f32.gmra.mrb[0].mxu0 %v461
    %v566 = vpop.f32.mrb[0].mxu0
    %v567 = vadd.f32 %v406, %v566
    %v568 = vpop.f32.mrb[0].mxu0
    %569 = vmatprep.mubr.f32.mxu0 0.0
    %570 = vmatmul.mubr.f32.gmra.mrb[0].mxu0 %v464
    %v571 = vpop.f32.mrb[0].mxu0
    %v572 = vadd.f32 %v411, %v571
    %v573 = vpop.f32.mrb[0].mxu0
    %574 = vmatprep.mubr.f32.mxu0 0.0
    %575 = vmatmul.mubr.f32.gmra.mrb[0].mxu0 %v467
    %v576 = vpop.f32.mrb[0].mxu0
    %v577 = vadd.f32 %v416, %v576
    %v578 = vpop.f32.mrb[0].mxu0
    %579 = vmatprep.mubr.f32.mxu0 0.0
    %580 = vmatmul.mubr.f32.gmra.mrb[0].mxu0 %v470
    %v581 = vpop.f32.mrb[0].mxu0
    %v582 = vadd.f32 %v421, %v581
    %v583 = vpop.f32.mrb[0].mxu0
    %584 = vmatprep.mubr.f32.mxu0 0.0
    %585 = vmatmul.mubr.f32.gmra.mrb[0].mxu0 %v473
    %v586 = vpop.f32.mrb[0].mxu0
    %v587 = vadd.f32 %v426, %v586
    %v588 = vpop.f32.mrb[0].mxu0
    %589 = vmatprep.mubr.f32.mxu0 0.0
    %590 = vmatmul.mubr.f32.gmra.mrb[0].mxu0 %v476
    %v591 = vpop.f32.mrb[0].mxu0
    %v592 = vadd.f32 %v431, %v591
    %v593 = vpop.f32.mrb[0].mxu0
    %594 = vmatprep.mubr.f32.mxu0 0.0
    %595 = vmatmul.mubr.f32.gmra.mrb[0].mxu0 %v479
    %v596 = vpop.f32.mrb[0].mxu0
    %v597 = vadd.f32 %v436, %v596
    %v598 = vpop.f32.mrb[0].mxu0
    %599 = vmatprep.mubr.f32.mxu0 0.0
    %600 = vmatmul.mubr.f32.gmra.mrb[0].mxu0 %v482
    %v601 = vpop.f32.mrb[0].mxu0
    %v602 = vadd.f32 %v441, %v601
    %v603 = vpop.f32.mrb[0].mxu0
    %604 = vmatprep.mubr.f32.mxu0 0.0
    %605 = vmatmul.mubr.f32.gmra.mrb[0].mxu0 %v485
    %v606 = vpop.f32.mrb[0].mxu0
    %v607 = vadd.f32 %v446, %v606
    %v608 = vpop.f32.mrb[0].mxu0
    %609 = vmatprep.mubr.f32.mxu0 0.0
    %610 = vmatmul.mubr.f32.gmra.mrb[0].mxu0 %v488
    %v611 = vpop.f32.mrb[0].mxu0
    %v612 = vadd.f32 %v451, %v611
    %v613 = vpop.f32.mrb[0].mxu0
    %614 = vdwg.mxu0
    %v615 = vrot.slane %v33, 1
    %v616 = vrot.slane %v34, 1
    %v617 = vrot.slane %v35, 1
    %v618 = vrot.slane %v36, 1
    %v619 = vrot.slane %v37, 1
    %v620 = vrot.slane %v38, 1
    %v621 = vrot.slane %v39, 1
    %v622 = vrot.slane %v40, 1
    %v623 = vrot.slane %v41, 1
    %v624 = vrot.slane %v42, 1
    %v625 = vrot.slane %v43, 1
    %v626 = vrot.slane %v44, 1
    %vm627 = vcmp.lt.s32.totalorder %v46, 7
    %v628 = vsel %vm627, %v625, %v626
    %v629 = vsel %vm627, %v624, %v625
    %v630 = vsel %vm627, %v623, %v624
    %v631 = vsel %vm627, %v622, %v623
    %v632 = vsel %vm627, %v621, %v622
    %v633 = vsel %vm627, %v620, %v621
    %v634 = vsel %vm627, %v619, %v620
    %v635 = vsel %vm627, %v618, %v619
    %v636 = vsel %vm627, %v617, %v618
    %v637 = vsel %vm627, %v616, %v617
    %v638 = vsel %vm627, %v615, %v616
    %v639 = vsel %vm627, %v626, %v615
    %v640 = vsel %vm214, 1, 0
    %v641 = vsel %vm215, 1, 0
    %v642 = vsel %vm216, 1, 0
    %v643 = vsel %vm217, 1, 0
    %v644 = vsel %vm218, 1, 0
    %v645 = vsel %vm219, 1, 0
    %v646 = vsel %vm220, 1, 0
    %v647 = vsel %vm221, 1, 0
    %v648 = vsel %vm222, 1, 0
    %v649 = vsel %vm223, 1, 0
    %v650 = vsel %vm224, 1, 0
    %v651 = vsel %vm225, 1, 0
    %vm652 = vcmp.eq.s32.totalorder %v640, 1
    %vm653 = vcmp.eq.s32.totalorder %v641, 1
    %vm654 = vcmp.eq.s32.totalorder %v642, 1
    %vm655 = vcmp.eq.s32.totalorder %v643, 1
    %vm656 = vcmp.eq.s32.totalorder %v644, 1
    %vm657 = vcmp.eq.s32.totalorder %v645, 1
    %vm658 = vcmp.eq.s32.totalorder %v646, 1
    %vm659 = vcmp.eq.s32.totalorder %v647, 1
    %vm660 = vcmp.eq.s32.totalorder %v648, 1
    %vm661 = vcmp.eq.s32.totalorder %v649, 1
    %vm662 = vcmp.eq.s32.totalorder %v650, 1
    %vm663 = vcmp.eq.s32.totalorder %v651, 1
    %v664 = vsel %vm652, 0.0, %v638
    %v665 = vsel %vm653, 0.0, %v637
    %v666 = vsel %vm654, 0.0, %v636
    %v667 = vsel %vm655, 0.0, %v635
    %v668 = vsel %vm656, 0.0, %v634
    %v669 = vsel %vm657, 0.0, %v633
    %v670 = vsel %vm658, 0.0, %v632
    %v671 = vsel %vm659, 0.0, %v631
    %v672 = vsel %vm660, 0.0, %v630
    %v673 = vsel %vm661, 0.0, %v629
    %v674 = vsel %vm662, 0.0, %v628
    %v675 = vsel %vm663, 0.0, %v639
    %s676 = scalar_lea.vmem %s1, 32
    %v677 = vld [vmem:[%s676] sm:$0xff]
    %v678 = vld [vmem:[%s676 + $0x8] sm:$0xff]
    %v680 = vsel %vm292, %v664, 0
    %v683 = vsel %vm292, %v665, 0
    %v686 = vsel %vm292, %v666, 0
    %v689 = vsel %vm292, %v667, 0
    %v692 = vsel %vm292, %v668, 0
    %v695 = vsel %vm292, %v669, 0
    %v698 = vsel %vm292, %v670, 0
    %v701 = vsel %vm292, %v671, 0
    %v704 = vsel %vm292, %v672, 0
    %v707 = vsel %vm292, %v673, 0
    %v710 = vsel %vm292, %v674, 0
    %v713 = vsel %vm292, %v675, 0
    %715 = vmatprep.subr.mxu0 0.0
    %716 = vmatpush1.msra.mxu0 %v677
    %717 = vmatprep.subr.mxu0 0.0
    %718 = vmatpush1.msra.mxu0 %v678
    %719 = vmatprep.subr.mxu0 0.0
    %720 = vmatpush1.msra.mxu0 0.0
    %721 = vmatprep.subr.mxu0 0.0
    %722 = vmatpush1.msra.mxu0 0.0
    %723 = vmatprep.subr.mxu0 0.0
    %724 = vmatpush1.msra.mxu0 0.0
    %725 = vmatprep.subr.mxu0 0.0
    %726 = vmatpush1.msra.mxu0 0.0
    %727 = vmatprep.subr.mxu0 0.0
    %728 = vmatpush1.msra.mxu0 0.0
    %729 = vmatprep.subr.mxu0 0.0
    %730 = vmatpush1.msra.mxu0 0.0
    %731 = vmatprep.subr.mxu0 0.0
    %732 = vmatpush1.msra.mxu0 0.0
    %733 = vmatprep.subr.mxu0 0.0
    %734 = vmatpush1.msra.mxu0 0.0
    %735 = vmatprep.subr.mxu0 0.0
    %736 = vmatpush1.msra.mxu0 0.0
    %737 = vmatprep.subr.mxu0 0.0
    %738 = vmatpush1.msra.mxu0 0.0
    %739 = vmatprep.subr.mxu0 0.0
    %740 = vmatpush1.msra.mxu0 0.0
    %741 = vmatprep.subr.mxu0 0.0
    %742 = vmatpush1.msra.mxu0 0.0
    %743 = vmatprep.subr.mxu0 0.0
    %744 = vmatpush1.msra.mxu0 0.0
    %745 = vmatprep.subr.mxu0 0.0
    %746 = vmatpush1.msra.mxu0 0.0
    %747 = vmatprep.subr.mxu0 0.0
    %748 = vmatpush1.msra.mxu0 0.0
    %749 = vmatprep.subr.mxu0 0.0
    %750 = vmatpush1.msra.mxu0 0.0
    %751 = vmatprep.subr.mxu0 0.0
    %752 = vmatpush1.msra.mxu0 0.0
    %753 = vmatprep.subr.mxu0 0.0
    %754 = vmatpush1.msra.mxu0 0.0
    %755 = vmatprep.subr.mxu0 0.0
    %756 = vmatpush1.msra.mxu0 0.0
    %757 = vmatprep.subr.mxu0 0.0
    %758 = vmatpush1.msra.mxu0 0.0
    %759 = vmatprep.subr.mxu0 0.0
    %760 = vmatpush1.msra.mxu0 0.0
    %761 = vmatprep.subr.mxu0 0.0
    %762 = vmatpush1.msra.mxu0 0.0
    %763 = vmatprep.subr.mxu0 0.0
    %764 = vmatpush1.msra.mxu0 0.0
    %765 = vmatprep.subr.mxu0 0.0
    %766 = vmatpush1.msra.mxu0 0.0
    %767 = vmatprep.subr.mxu0 0.0
    %768 = vmatpush1.msra.mxu0 0.0
    %769 = vmatprep.subr.mxu0 0.0
    %770 = vmatpush1.msra.mxu0 0.0
    %771 = vmatprep.subr.mxu0 0.0
    %772 = vmatpush1.msra.mxu0 0.0
    %773 = vmatprep.subr.mxu0 0.0
    %774 = vmatpush1.msra.mxu0 0.0
    %775 = vmatprep.subr.mxu0 0.0
    %776 = vmatpush1.msra.mxu0 0.0
    %777 = vmatprep.subr.mxu0 0.0
    %778 = vmatpush1.msra.mxu0 0.0
    %779 = vmatprep.mubr.f32.mxu0 0.0
    %780 = vmatmul.mubr.f32.gmra.mrb[0].mxu0 %v680
    %v781 = vpop.f32.mrb[0].mxu0
    %v782 = vadd.f32 0.0, %v781
    %v783 = vpop.f32.mrb[0].mxu0
    %784 = vmatprep.mubr.f32.mxu0 0.0
    %785 = vmatmul.mubr.f32.gmra.mrb[0].mxu0 %v683
    %v786 = vpop.f32.mrb[0].mxu0
    %v787 = vadd.f32 0.0, %v786
    %v788 = vpop.f32.mrb[0].mxu0
    %789 = vmatprep.mubr.f32.mxu0 0.0
    %790 = vmatmul.mubr.f32.gmra.mrb[0].mxu0 %v686
    %v791 = vpop.f32.mrb[0].mxu0
    %v792 = vadd.f32 0.0, %v791
    %v793 = vpop.f32.mrb[0].mxu0
    %794 = vmatprep.mubr.f32.mxu0 0.0
    %795 = vmatmul.mubr.f32.gmra.mrb[0].mxu0 %v689
    %v796 = vpop.f32.mrb[0].mxu0
    %v797 = vadd.f32 0.0, %v796
    %v798 = vpop.f32.mrb[0].mxu0
    %799 = vmatprep.mubr.f32.mxu0 0.0
    %800 = vmatmul.mubr.f32.gmra.mrb[0].mxu0 %v692
    %v801 = vpop.f32.mrb[0].mxu0
    %v802 = vadd.f32 0.0, %v801
    %v803 = vpop.f32.mrb[0].mxu0
    %804 = vmatprep.mubr.f32.mxu0 0.0
    %805 = vmatmul.mubr.f32.gmra.mrb[0].mxu0 %v695
    %v806 = vpop.f32.mrb[0].mxu0
    %v807 = vadd.f32 0.0, %v806
    %v808 = vpop.f32.mrb[0].mxu0
    %809 = vmatprep.mubr.f32.mxu0 0.0
    %810 = vmatmul.mubr.f32.gmra.mrb[0].mxu0 %v698
    %v811 = vpop.f32.mrb[0].mxu0
    %v812 = vadd.f32 0.0, %v811
    %v813 = vpop.f32.mrb[0].mxu0
    %814 = vmatprep.mubr.f32.mxu0 0.0
    %815 = vmatmul.mubr.f32.gmra.mrb[0].mxu0 %v701
    %v816 = vpop.f32.mrb[0].mxu0
    %v817 = vadd.f32 0.0, %v816
    %v818 = vpop.f32.mrb[0].mxu0
    %819 = vmatprep.mubr.f32.mxu0 0.0
    %820 = vmatmul.mubr.f32.gmra.mrb[0].mxu0 %v704
    %v821 = vpop.f32.mrb[0].mxu0
    %v822 = vadd.f32 0.0, %v821
    %v823 = vpop.f32.mrb[0].mxu0
    %824 = vmatprep.mubr.f32.mxu0 0.0
    %825 = vmatmul.mubr.f32.gmra.mrb[0].mxu0 %v707
    %v826 = vpop.f32.mrb[0].mxu0
    %v827 = vadd.f32 0.0, %v826
    %v828 = vpop.f32.mrb[0].mxu0
    %829 = vmatprep.mubr.f32.mxu0 0.0
    %830 = vmatmul.mubr.f32.gmra.mrb[0].mxu0 %v710
    %v831 = vpop.f32.mrb[0].mxu0
    %v832 = vadd.f32 0.0, %v831
    %v833 = vpop.f32.mrb[0].mxu0
    %834 = vmatprep.mubr.f32.mxu0 0.0
    %835 = vmatmul.mubr.f32.gmra.mrb[0].mxu0 %v713
    %v836 = vpop.f32.mrb[0].mxu0
    %v837 = vadd.f32 0.0, %v836
    %v838 = vpop.f32.mrb[0].mxu0
    %839 = vdwg.mxu0
    %v840 = vadd.f32 %v557, %v782
    %v841 = vadd.f32 %v562, %v787
    %v842 = vadd.f32 %v567, %v792
    %v843 = vadd.f32 %v572, %v797
    %v844 = vadd.f32 %v577, %v802
    %v845 = vadd.f32 %v582, %v807
    %v846 = vadd.f32 %v587, %v812
    %v847 = vadd.f32 %v592, %v817
    %v848 = vadd.f32 %v597, %v822
    %v849 = vadd.f32 %v602, %v827
    %v850 = vadd.f32 %v607, %v832
    %v851 = vadd.f32 %v612, %v837
    %v852 = vld [vmem:[%s2] sm:$0x1]
    %v854 = vlaneseq
    %v855 = vshrl.u32 %v854, 7
    %v856 = vsub.s32 0, %v855
    %v857 = vrot.slane %v852, %v856
    %v859 = vadd.f32 %v840, %v857
    %v860 = vadd.f32 %v841, %v857
    %v861 = vadd.f32 %v842, %v857
    %v862 = vadd.f32 %v843, %v857
    %v863 = vadd.f32 %v844, %v857
    %v864 = vadd.f32 %v845, %v857
    %v865 = vadd.f32 %v846, %v857
    %v866 = vadd.f32 %v847, %v857
    %v867 = vadd.f32 %v848, %v857
    %v868 = vadd.f32 %v849, %v857
    %v869 = vadd.f32 %v850, %v857
    %v870 = vadd.f32 %v851, %v857
    %v871 = vmax.f32 %v859, 0.0
    %v872 = vmax.f32 %v860, 0.0
    %v873 = vmax.f32 %v861, 0.0
    %v874 = vmax.f32 %v862, 0.0
    %v875 = vmax.f32 %v863, 0.0
    %v876 = vmax.f32 %v864, 0.0
    %v877 = vmax.f32 %v865, 0.0
    %v878 = vmax.f32 %v866, 0.0
    %v879 = vmax.f32 %v867, 0.0
    %v880 = vmax.f32 %v868, 0.0
    %v881 = vmax.f32 %v869, 0.0
    %v882 = vmax.f32 %v870, 0.0
    %v883 = vrot.slane %v871, 7
    %v884 = vrot.slane %v872, 7
    %v885 = vrot.slane %v873, 7
    %v886 = vrot.slane %v874, 7
    %v887 = vrot.slane %v875, 7
    %v888 = vrot.slane %v876, 7
    %v889 = vrot.slane %v877, 7
    %v890 = vrot.slane %v878, 7
    %v891 = vrot.slane %v879, 7
    %v892 = vrot.slane %v880, 7
    %v893 = vrot.slane %v881, 7
    %v894 = vrot.slane %v882, 7
    %v895 = vsel %vm238, %v893, %v894
    %v896 = vsel %vm238, %v892, %v893
    %v897 = vsel %vm238, %v891, %v892
    %v898 = vsel %vm238, %v890, %v891
    %v899 = vsel %vm238, %v889, %v890
    %v900 = vsel %vm238, %v888, %v889
    %v901 = vsel %vm238, %v887, %v888
    %v902 = vsel %vm238, %v886, %v887
    %v903 = vsel %vm238, %v885, %v886
    %v904 = vsel %vm238, %v884, %v885
    %v905 = vsel %vm238, %v883, %v884
    %v906 = vsel %vm238, %v894, %v883
    %v907 = vsel %vm263, 0.0, %v906
    %v908 = vsel %vm264, 0.0, %v905
    %v909 = vsel %vm265, 0.0, %v904
    %v910 = vsel %vm266, 0.0, %v903
    %v911 = vsel %vm267, 0.0, %v902
    %v912 = vsel %vm268, 0.0, %v901
    %v913 = vsel %vm269, 0.0, %v900
    %v914 = vsel %vm270, 0.0, %v899
    %v915 = vsel %vm271, 0.0, %v898
    %v916 = vsel %vm272, 0.0, %v897
    %v917 = vsel %vm273, 0.0, %v896
    %v918 = vsel %vm274, 0.0, %v895
    %v919 = vld [vmem:[%s3] sm:$0xff]
    %v920 = vld [vmem:[%s3 + $0x8] sm:$0xff]
    %v921 = vld [vmem:[%s3 + $0x10] sm:$0xff]
    %v922 = vld [vmem:[%s3 + $0x18] sm:$0xff]
    %v923 = vld [vmem:[%s3 + $0x20] sm:$0xff]
    %v924 = vld [vmem:[%s3 + $0x28] sm:$0xff]
    %v925 = vld [vmem:[%s3 + $0x30] sm:$0xff]
    %v926 = vld [vmem:[%s3 + $0x38] sm:$0xff]
    %v927 = vld [vmem:[%s3 + $0x40] sm:$0xff]
    %v928 = vld [vmem:[%s3 + $0x48] sm:$0xff]
    %v929 = vld [vmem:[%s3 + $0x50] sm:$0xff]
    %v930 = vld [vmem:[%s3 + $0x58] sm:$0xff]
    %v931 = vld [vmem:[%s3 + $0x60] sm:$0xff]
    %v932 = vld [vmem:[%s3 + $0x68] sm:$0xff]
    %v933 = vld [vmem:[%s3 + $0x70] sm:$0xff]
    %v934 = vld [vmem:[%s3 + $0x78] sm:$0xff]
    %v935 = vld [vmem:[%s3 + $0x80] sm:$0xff]
    %v936 = vld [vmem:[%s3 + $0x88] sm:$0xff]
    %v937 = vld [vmem:[%s3 + $0x90] sm:$0xff]
    %v938 = vld [vmem:[%s3 + $0x98] sm:$0xff]
    %v939 = vld [vmem:[%s3 + $0xa0] sm:$0xff]
    %v940 = vld [vmem:[%s3 + $0xa8] sm:$0xff]
    %v941 = vld [vmem:[%s3 + $0xb0] sm:$0xff]
    %v942 = vld [vmem:[%s3 + $0xb8] sm:$0xff]
    %v943 = vld [vmem:[%s3 + $0xc0] sm:$0xff]
    %v944 = vld [vmem:[%s3 + $0xc8] sm:$0xff]
    %v945 = vld [vmem:[%s3 + $0xd0] sm:$0xff]
    %v946 = vld [vmem:[%s3 + $0xd8] sm:$0xff]
    %v947 = vld [vmem:[%s3 + $0xe0] sm:$0xff]
    %v948 = vld [vmem:[%s3 + $0xe8] sm:$0xff]
    %v949 = vld [vmem:[%s3 + $0xf0] sm:$0xff]
    %v950 = vld [vmem:[%s3 + $0xf8] sm:$0xff]
    %s951 = scalar_lea.vmem %s3, 256
    %v952 = vld [vmem:[%s951] sm:$0xff]
    %v953 = vld [vmem:[%s951 + $0x8] sm:$0xff]
    %v954 = vld [vmem:[%s951 + $0x10] sm:$0xff]
    %v955 = vld [vmem:[%s951 + $0x18] sm:$0xff]
    %v956 = vld [vmem:[%s951 + $0x20] sm:$0xff]
    %v957 = vld [vmem:[%s951 + $0x28] sm:$0xff]
    %v958 = vld [vmem:[%s951 + $0x30] sm:$0xff]
    %v959 = vld [vmem:[%s951 + $0x38] sm:$0xff]
    %v960 = vld [vmem:[%s951 + $0x40] sm:$0xff]
    %v961 = vld [vmem:[%s951 + $0x48] sm:$0xff]
    %v962 = vld [vmem:[%s951 + $0x50] sm:$0xff]
    %v963 = vld [vmem:[%s951 + $0x58] sm:$0xff]
    %v964 = vld [vmem:[%s951 + $0x60] sm:$0xff]
    %v965 = vld [vmem:[%s951 + $0x68] sm:$0xff]
    %v966 = vld [vmem:[%s951 + $0x70] sm:$0xff]
    %v967 = vld [vmem:[%s951 + $0x78] sm:$0xff]
    %v968 = vld [vmem:[%s951 + $0x80] sm:$0xff]
    %v969 = vld [vmem:[%s951 + $0x88] sm:$0xff]
    %v970 = vld [vmem:[%s951 + $0x90] sm:$0xff]
    %v971 = vld [vmem:[%s951 + $0x98] sm:$0xff]
    %v972 = vld [vmem:[%s951 + $0xa0] sm:$0xff]
    %v973 = vld [vmem:[%s951 + $0xa8] sm:$0xff]
    %v974 = vld [vmem:[%s951 + $0xb0] sm:$0xff]
    %v975 = vld [vmem:[%s951 + $0xb8] sm:$0xff]
    %v976 = vld [vmem:[%s951 + $0xc0] sm:$0xff]
    %v977 = vld [vmem:[%s951 + $0xc8] sm:$0xff]
    %v978 = vld [vmem:[%s951 + $0xd0] sm:$0xff]
    %v979 = vld [vmem:[%s951 + $0xd8] sm:$0xff]
    %v980 = vld [vmem:[%s951 + $0xe0] sm:$0xff]
    %v981 = vld [vmem:[%s951 + $0xe8] sm:$0xff]
    %v982 = vld [vmem:[%s951 + $0xf0] sm:$0xff]
    %v983 = vld [vmem:[%s951 + $0xf8] sm:$0xff]
    %984 = vmatprep.subr.mxu0 %v953
    %985 = vmatpush1.msra.mxu0 %v952
    %986 = vmatprep.subr.mxu0 %v955
    %987 = vmatpush1.msra.mxu0 %v954
    %988 = vmatprep.subr.mxu0 %v957
    %989 = vmatpush1.msra.mxu0 %v956
    %990 = vmatprep.subr.mxu0 %v959
    %991 = vmatpush1.msra.mxu0 %v958
    %992 = vmatprep.subr.mxu0 %v961
    %993 = vmatpush1.msra.mxu0 %v960
    %994 = vmatprep.subr.mxu0 %v963
    %995 = vmatpush1.msra.mxu0 %v962
    %996 = vmatprep.subr.mxu0 %v965
    %997 = vmatpush1.msra.mxu0 %v964
    %998 = vmatprep.subr.mxu0 %v967
    %999 = vmatpush1.msra.mxu0 %v966
    %1000 = vmatprep.subr.mxu0 %v969
    %1001 = vmatpush1.msra.mxu0 %v968
    %1002 = vmatprep.subr.mxu0 %v971
    %1003 = vmatpush1.msra.mxu0 %v970
    %1004 = vmatprep.subr.mxu0 %v973
    %1005 = vmatpush1.msra.mxu0 %v972
    %1006 = vmatprep.subr.mxu0 %v975
    %1007 = vmatpush1.msra.mxu0 %v974
    %1008 = vmatprep.subr.mxu0 %v977
    %1009 = vmatpush1.msra.mxu0 %v976
    %1010 = vmatprep.subr.mxu0 %v979
    %1011 = vmatpush1.msra.mxu0 %v978
    %1012 = vmatprep.subr.mxu0 %v981
    %1013 = vmatpush1.msra.mxu0 %v980
    %1014 = vmatprep.subr.mxu0 %v983
    %1015 = vmatpush1.msra.mxu0 %v982
    %1016 = vmatprep.subr.mxu0 0.0
    %1017 = vmatpush1.msra.mxu0 0.0
    %1018 = vmatprep.subr.mxu0 0.0
    %1019 = vmatpush1.msra.mxu0 0.0
    %1020 = vmatprep.subr.mxu0 0.0
    %1021 = vmatpush1.msra.mxu0 0.0
    %1022 = vmatprep.subr.mxu0 0.0
    %1023 = vmatpush1.msra.mxu0 0.0
    %1024 = vmatprep.subr.mxu0 0.0
    %1025 = vmatpush1.msra.mxu0 0.0
    %1026 = vmatprep.subr.mxu0 0.0
    %1027 = vmatpush1.msra.mxu0 0.0
    %1028 = vmatprep.subr.mxu0 0.0
    %1029 = vmatpush1.msra.mxu0 0.0
    %1030 = vmatprep.subr.mxu0 0.0
    %1031 = vmatpush1.msra.mxu0 0.0
    %1032 = vmatprep.subr.mxu0 0.0
    %1033 = vmatpush1.msra.mxu0 0.0
    %1034 = vmatprep.subr.mxu0 0.0
    %1035 = vmatpush1.msra.mxu0 0.0
    %1036 = vmatprep.subr.mxu0 0.0
    %1037 = vmatpush1.msra.mxu0 0.0
    %1038 = vmatprep.subr.mxu0 0.0
    %1039 = vmatpush1.msra.mxu0 0.0
    %1040 = vmatprep.subr.mxu0 0.0
    %1041 = vmatpush1.msra.mxu0 0.0
    %1042 = vmatprep.subr.mxu0 0.0
    %1043 = vmatpush1.msra.mxu0 0.0
    %1044 = vmatprep.subr.mxu0 0.0
    %1045 = vmatpush1.msra.mxu0 0.0
    %1046 = vmatprep.subr.mxu0 0.0
    %1047 = vmatpush1.msra.mxu0 0.0
    %1048 = vmatprep.mubr.f32.mxu0 0.0
    %1049 = vmatmul.mubr.f32.gmra.mrb[0].mxu0 %v871
    %v1050 = vpop.f32.mrb[0].mxu0
    %v1051 = vadd.f32 0.0, %v1050
    %v1052 = vpop.f32.mrb[0].mxu0
    %v1053 = vadd.f32 0.0, %v1052
    %1054 = vmatprep.mubr.f32.mxu0 0.0
    %1055 = vmatmul.mubr.f32.gmra.mrb[0].mxu0 %v872
    %v1056 = vpop.f32.mrb[0].mxu0
    %v1057 = vadd.f32 0.0, %v1056
    %v1058 = vpop.f32.mrb[0].mxu0
    %v1059 = vadd.f32 0.0, %v1058
    %1060 = vmatprep.mubr.f32.mxu0 0.0
    %1061 = vmatmul.mubr.f32.gmra.mrb[0].mxu0 %v873
    %v1062 = vpop.f32.mrb[0].mxu0
    %v1063 = vadd.f32 0.0, %v1062
    %v1064 = vpop.f32.mrb[0].mxu0
    %v1065 = vadd.f32 0.0, %v1064
    %1066 = vmatprep.mubr.f32.mxu0 0.0
    %1067 = vmatmul.mubr.f32.gmra.mrb[0].mxu0 %v874
    %v1068 = vpop.f32.mrb[0].mxu0
    %v1069 = vadd.f32 0.0, %v1068
    %v1070 = vpop.f32.mrb[0].mxu0
    %v1071 = vadd.f32 0.0, %v1070
    %1072 = vmatprep.mubr.f32.mxu0 0.0
    %1073 = vmatmul.mubr.f32.gmra.mrb[0].mxu0 %v875
    %v1074 = vpop.f32.mrb[0].mxu0
    %v1075 = vadd.f32 0.0, %v1074
    %v1076 = vpop.f32.mrb[0].mxu0
    %v1077 = vadd.f32 0.0, %v1076
    %1078 = vmatprep.mubr.f32.mxu0 0.0
    %1079 = vmatmul.mubr.f32.gmra.mrb[0].mxu0 %v876
    %v1080 = vpop.f32.mrb[0].mxu0
    %v1081 = vadd.f32 0.0, %v1080
    %v1082 = vpop.f32.mrb[0].mxu0
    %v1083 = vadd.f32 0.0, %v1082
    %1084 = vmatprep.mubr.f32.mxu0 0.0
    %1085 = vmatmul.mubr.f32.gmra.mrb[0].mxu0 %v877
    %v1086 = vpop.f32.mrb[0].mxu0
    %v1087 = vadd.f32 0.0, %v1086
    %v1088 = vpop.f32.mrb[0].mxu0
    %v1089 = vadd.f32 0.0, %v1088
    %1090 = vmatprep.mubr.f32.mxu0 0.0
    %1091 = vmatmul.mubr.f32.gmra.mrb[0].mxu0 %v878
    %v1092 = vpop.f32.mrb[0].mxu0
    %v1093 = vadd.f32 0.0, %v1092
    %v1094 = vpop.f32.mrb[0].mxu0
    %v1095 = vadd.f32 0.0, %v1094
    %1096 = vmatprep.mubr.f32.mxu0 0.0
    %1097 = vmatmul.mubr.f32.gmra.mrb[0].mxu0 %v879
    %v1098 = vpop.f32.mrb[0].mxu0
    %v1099 = vadd.f32 0.0, %v1098
    %v1100 = vpop.f32.mrb[0].mxu0
    %v1101 = vadd.f32 0.0, %v1100
    %1102 = vmatprep.mubr.f32.mxu0 0.0
    %1103 = vmatmul.mubr.f32.gmra.mrb[0].mxu0 %v880
    %v1104 = vpop.f32.mrb[0].mxu0
    %v1105 = vadd.f32 0.0, %v1104
    %v1106 = vpop.f32.mrb[0].mxu0
    %v1107 = vadd.f32 0.0, %v1106
    %1108 = vmatprep.mubr.f32.mxu0 0.0
    %1109 = vmatmul.mubr.f32.gmra.mrb[0].mxu0 %v881
    %v1110 = vpop.f32.mrb[0].mxu0
    %v1111 = vadd.f32 0.0, %v1110
    %v1112 = vpop.f32.mrb[0].mxu0
    %v1113 = vadd.f32 0.0, %v1112
    %1114 = vmatprep.mubr.f32.mxu0 0.0
    %1115 = vmatmul.mubr.f32.gmra.mrb[0].mxu0 %v882
    %v1116 = vpop.f32.mrb[0].mxu0
    %v1117 = vadd.f32 0.0, %v1116
    %v1118 = vpop.f32.mrb[0].mxu0
    %v1119 = vadd.f32 0.0, %v1118
    %1120 = vdwg.mxu0
    %1121 = vmatprep.subr.mxu0 %v920
    %1122 = vmatpush1.msra.mxu0 %v919
    %1123 = vmatprep.subr.mxu0 %v922
    %1124 = vmatpush1.msra.mxu0 %v921
    %1125 = vmatprep.subr.mxu0 %v924
    %1126 = vmatpush1.msra.mxu0 %v923
    %1127 = vmatprep.subr.mxu0 %v926
    %1128 = vmatpush1.msra.mxu0 %v925
    %1129 = vmatprep.subr.mxu0 %v928
    %1130 = vmatpush1.msra.mxu0 %v927
    %1131 = vmatprep.subr.mxu0 %v930
    %1132 = vmatpush1.msra.mxu0 %v929
    %1133 = vmatprep.subr.mxu0 %v932
    %1134 = vmatpush1.msra.mxu0 %v931
    %1135 = vmatprep.subr.mxu0 %v934
    %1136 = vmatpush1.msra.mxu0 %v933
    %1137 = vmatprep.subr.mxu0 %v936
    %1138 = vmatpush1.msra.mxu0 %v935
    %1139 = vmatprep.subr.mxu0 %v938
    %1140 = vmatpush1.msra.mxu0 %v937
    %1141 = vmatprep.subr.mxu0 %v940
    %1142 = vmatpush1.msra.mxu0 %v939
    %1143 = vmatprep.subr.mxu0 %v942
    %1144 = vmatpush1.msra.mxu0 %v941
    %1145 = vmatprep.subr.mxu0 %v944
    %1146 = vmatpush1.msra.mxu0 %v943
    %1147 = vmatprep.subr.mxu0 %v946
    %1148 = vmatpush1.msra.mxu0 %v945
    %1149 = vmatprep.subr.mxu0 %v948
    %1150 = vmatpush1.msra.mxu0 %v947
    %1151 = vmatprep.subr.mxu0 %v950
    %1152 = vmatpush1.msra.mxu0 %v949
    %1153 = vmatprep.subr.mxu0 0.0
    %1154 = vmatpush1.msra.mxu0 0.0
    %1155 = vmatprep.subr.mxu0 0.0
    %1156 = vmatpush1.msra.mxu0 0.0
    %1157 = vmatprep.subr.mxu0 0.0
    %1158 = vmatpush1.msra.mxu0 0.0
    %1159 = vmatprep.subr.mxu0 0.0
    %1160 = vmatpush1.msra.mxu0 0.0
    %1161 = vmatprep.subr.mxu0 0.0
    %1162 = vmatpush1.msra.mxu0 0.0
    %1163 = vmatprep.subr.mxu0 0.0
    %1164 = vmatpush1.msra.mxu0 0.0
    %1165 = vmatprep.subr.mxu0 0.0
    %1166 = vmatpush1.msra.mxu0 0.0
    %1167 = vmatprep.subr.mxu0 0.0
    %1168 = vmatpush1.msra.mxu0 0.0
    %1169 = vmatprep.subr.mxu0 0.0
    %1170 = vmatpush1.msra.mxu0 0.0
    %1171 = vmatprep.subr.mxu0 0.0
    %1172 = vmatpush1.msra.mxu0 0.0
    %1173 = vmatprep.subr.mxu0 0.0
    %1174 = vmatpush1.msra.mxu0 0.0
    %1175 = vmatprep.subr.mxu0 0.0
    %1176 = vmatpush1.msra.mxu0 0.0
    %1177 = vmatprep.subr.mxu0 0.0
    %1178 = vmatpush1.msra.mxu0 0.0
    %1179 = vmatprep.subr.mxu0 0.0
    %1180 = vmatpush1.msra.mxu0 0.0
    %1181 = vmatprep.subr.mxu0 0.0
    %1182 = vmatpush1.msra.mxu0 0.0
    %1183 = vmatprep.subr.mxu0 0.0
    %1184 = vmatpush1.msra.mxu0 0.0
    %1185 = vmatprep.mubr.f32.mxu0 0.0
    %1186 = vmatmul.mubr.f32.gmra.mrb[0].mxu0 %v907
    %v1187 = vpop.f32.mrb[0].mxu0
    %v1188 = vadd.f32 %v1051, %v1187
    %v1189 = vpop.f32.mrb[0].mxu0
    %v1190 = vadd.f32 %v1053, %v1189
    %1191 = vmatprep.mubr.f32.mxu0 0.0
    %1192 = vmatmul.mubr.f32.gmra.mrb[0].mxu0 %v908
    %v1193 = vpop.f32.mrb[0].mxu0
    %v1194 = vadd.f32 %v1057, %v1193
    %v1195 = vpop.f32.mrb[0].mxu0
    %v1196 = vadd.f32 %v1059, %v1195
    %1197 = vmatprep.mubr.f32.mxu0 0.0
    %1198 = vmatmul.mubr.f32.gmra.mrb[0].mxu0 %v909
    %v1199 = vpop.f32.mrb[0].mxu0
    %v1200 = vadd.f32 %v1063, %v1199
    %v1201 = vpop.f32.mrb[0].mxu0
    %v1202 = vadd.f32 %v1065, %v1201
    %1203 = vmatprep.mubr.f32.mxu0 0.0
    %1204 = vmatmul.mubr.f32.gmra.mrb[0].mxu0 %v910
    %v1205 = vpop.f32.mrb[0].mxu0
    %v1206 = vadd.f32 %v1069, %v1205
    %v1207 = vpop.f32.mrb[0].mxu0
    %v1208 = vadd.f32 %v1071, %v1207
    %1209 = vmatprep.mubr.f32.mxu0 0.0
    %1210 = vmatmul.mubr.f32.gmra.mrb[0].mxu0 %v911
    %v1211 = vpop.f32.mrb[0].mxu0
    %v1212 = vadd.f32 %v1075, %v1211
    %v1213 = vpop.f32.mrb[0].mxu0
    %v1214 = vadd.f32 %v1077, %v1213
    %1215 = vmatprep.mubr.f32.mxu0 0.0
    %1216 = vmatmul.mubr.f32.gmra.mrb[0].mxu0 %v912
    %v1217 = vpop.f32.mrb[0].mxu0
    %v1218 = vadd.f32 %v1081, %v1217
    %v1219 = vpop.f32.mrb[0].mxu0
    %v1220 = vadd.f32 %v1083, %v1219
    %1221 = vmatprep.mubr.f32.mxu0 0.0
    %1222 = vmatmul.mubr.f32.gmra.mrb[0].mxu0 %v913
    %v1223 = vpop.f32.mrb[0].mxu0
    %v1224 = vadd.f32 %v1087, %v1223
    %v1225 = vpop.f32.mrb[0].mxu0
    %v1226 = vadd.f32 %v1089, %v1225
    %1227 = vmatprep.mubr.f32.mxu0 0.0
    %1228 = vmatmul.mubr.f32.gmra.mrb[0].mxu0 %v914
    %v1229 = vpop.f32.mrb[0].mxu0
    %v1230 = vadd.f32 %v1093, %v1229
    %v1231 = vpop.f32.mrb[0].mxu0
    %v1232 = vadd.f32 %v1095, %v1231
    %1233 = vmatprep.mubr.f32.mxu0 0.0
    %1234 = vmatmul.mubr.f32.gmra.mrb[0].mxu0 %v915
    %v1235 = vpop.f32.mrb[0].mxu0
    %v1236 = vadd.f32 %v1099, %v1235
    %v1237 = vpop.f32.mrb[0].mxu0
    %v1238 = vadd.f32 %v1101, %v1237
    %1239 = vmatprep.mubr.f32.mxu0 0.0
    %1240 = vmatmul.mubr.f32.gmra.mrb[0].mxu0 %v916
    %v1241 = vpop.f32.mrb[0].mxu0
    %v1242 = vadd.f32 %v1105, %v1241
    %v1243 = vpop.f32.mrb[0].mxu0
    %v1244 = vadd.f32 %v1107, %v1243
    %1245 = vmatprep.mubr.f32.mxu0 0.0
    %1246 = vmatmul.mubr.f32.gmra.mrb[0].mxu0 %v917
    %v1247 = vpop.f32.mrb[0].mxu0
    %v1248 = vadd.f32 %v1111, %v1247
    %v1249 = vpop.f32.mrb[0].mxu0
    %v1250 = vadd.f32 %v1113, %v1249
    %1251 = vmatprep.mubr.f32.mxu0 0.0
    %1252 = vmatmul.mubr.f32.gmra.mrb[0].mxu0 %v918
    %v1253 = vpop.f32.mrb[0].mxu0
    %v1254 = vadd.f32 %v1117, %v1253
    %v1255 = vpop.f32.mrb[0].mxu0
    %v1256 = vadd.f32 %v1119, %v1255
    %1257 = vdwg.mxu0
    %v1258 = vrot.slane %v871, 1
    %v1259 = vrot.slane %v872, 1
    %v1260 = vrot.slane %v873, 1
    %v1261 = vrot.slane %v874, 1
    %v1262 = vrot.slane %v875, 1
    %v1263 = vrot.slane %v876, 1
    %v1264 = vrot.slane %v877, 1
    %v1265 = vrot.slane %v878, 1
    %v1266 = vrot.slane %v879, 1
    %v1267 = vrot.slane %v880, 1
    %v1268 = vrot.slane %v881, 1
    %v1269 = vrot.slane %v882, 1
    %v1270 = vsel %vm627, %v1268, %v1269
    %v1271 = vsel %vm627, %v1267, %v1268
    %v1272 = vsel %vm627, %v1266, %v1267
    %v1273 = vsel %vm627, %v1265, %v1266
    %v1274 = vsel %vm627, %v1264, %v1265
    %v1275 = vsel %vm627, %v1263, %v1264
    %v1276 = vsel %vm627, %v1262, %v1263
    %v1277 = vsel %vm627, %v1261, %v1262
    %v1278 = vsel %vm627, %v1260, %v1261
    %v1279 = vsel %vm627, %v1259, %v1260
    %v1280 = vsel %vm627, %v1258, %v1259
    %v1281 = vsel %vm627, %v1269, %v1258
    %v1282 = vsel %vm652, 0.0, %v1280
    %v1283 = vsel %vm653, 0.0, %v1279
    %v1284 = vsel %vm654, 0.0, %v1278
    %v1285 = vsel %vm655, 0.0, %v1277
    %v1286 = vsel %vm656, 0.0, %v1276
    %v1287 = vsel %vm657, 0.0, %v1275
    %v1288 = vsel %vm658, 0.0, %v1274
    %v1289 = vsel %vm659, 0.0, %v1273
    %v1290 = vsel %vm660, 0.0, %v1272
    %v1291 = vsel %vm661, 0.0, %v1271
    %v1292 = vsel %vm662, 0.0, %v1270
    %v1293 = vsel %vm663, 0.0, %v1281
    %s1294 = scalar_lea.vmem %s3, 512
    %v1295 = vld [vmem:[%s1294] sm:$0xff]
    %v1296 = vld [vmem:[%s1294 + $0x8] sm:$0xff]
    %v1297 = vld [vmem:[%s1294 + $0x10] sm:$0xff]
    %v1298 = vld [vmem:[%s1294 + $0x18] sm:$0xff]
    %v1299 = vld [vmem:[%s1294 + $0x20] sm:$0xff]
    %v1300 = vld [vmem:[%s1294 + $0x28] sm:$0xff]
    %v1301 = vld [vmem:[%s1294 + $0x30] sm:$0xff]
    %v1302 = vld [vmem:[%s1294 + $0x38] sm:$0xff]
    %v1303 = vld [vmem:[%s1294 + $0x40] sm:$0xff]
    %v1304 = vld [vmem:[%s1294 + $0x48] sm:$0xff]
    %v1305 = vld [vmem:[%s1294 + $0x50] sm:$0xff]
    %v1306 = vld [vmem:[%s1294 + $0x58] sm:$0xff]
    %v1307 = vld [vmem:[%s1294 + $0x60] sm:$0xff]
    %v1308 = vld [vmem:[%s1294 + $0x68] sm:$0xff]
    %v1309 = vld [vmem:[%s1294 + $0x70] sm:$0xff]
    %v1310 = vld [vmem:[%s1294 + $0x78] sm:$0xff]
    %v1311 = vld [vmem:[%s1294 + $0x80] sm:$0xff]
    %v1312 = vld [vmem:[%s1294 + $0x88] sm:$0xff]
    %v1313 = vld [vmem:[%s1294 + $0x90] sm:$0xff]
    %v1314 = vld [vmem:[%s1294 + $0x98] sm:$0xff]
    %v1315 = vld [vmem:[%s1294 + $0xa0] sm:$0xff]
    %v1316 = vld [vmem:[%s1294 + $0xa8] sm:$0xff]
    %v1317 = vld [vmem:[%s1294 + $0xb0] sm:$0xff]
    %v1318 = vld [vmem:[%s1294 + $0xb8] sm:$0xff]
    %v1319 = vld [vmem:[%s1294 + $0xc0] sm:$0xff]
    %v1320 = vld [vmem:[%s1294 + $0xc8] sm:$0xff]
    %v1321 = vld [vmem:[%s1294 + $0xd0] sm:$0xff]
    %v1322 = vld [vmem:[%s1294 + $0xd8] sm:$0xff]
    %v1323 = vld [vmem:[%s1294 + $0xe0] sm:$0xff]
    %v1324 = vld [vmem:[%s1294 + $0xe8] sm:$0xff]
    %v1325 = vld [vmem:[%s1294 + $0xf0] sm:$0xff]
    %v1326 = vld [vmem:[%s1294 + $0xf8] sm:$0xff]
    %1327 = vmatprep.subr.mxu0 %v1296
    %1328 = vmatpush1.msra.mxu0 %v1295
    %1329 = vmatprep.subr.mxu0 %v1298
    %1330 = vmatpush1.msra.mxu0 %v1297
    %1331 = vmatprep.subr.mxu0 %v1300
    %1332 = vmatpush1.msra.mxu0 %v1299
    %1333 = vmatprep.subr.mxu0 %v1302
    %1334 = vmatpush1.msra.mxu0 %v1301
    %1335 = vmatprep.subr.mxu0 %v1304
    %1336 = vmatpush1.msra.mxu0 %v1303
    %1337 = vmatprep.subr.mxu0 %v1306
    %1338 = vmatpush1.msra.mxu0 %v1305
    %1339 = vmatprep.subr.mxu0 %v1308
    %1340 = vmatpush1.msra.mxu0 %v1307
    %1341 = vmatprep.subr.mxu0 %v1310
    %1342 = vmatpush1.msra.mxu0 %v1309
    %1343 = vmatprep.subr.mxu0 %v1312
    %1344 = vmatpush1.msra.mxu0 %v1311
    %1345 = vmatprep.subr.mxu0 %v1314
    %1346 = vmatpush1.msra.mxu0 %v1313
    %1347 = vmatprep.subr.mxu0 %v1316
    %1348 = vmatpush1.msra.mxu0 %v1315
    %1349 = vmatprep.subr.mxu0 %v1318
    %1350 = vmatpush1.msra.mxu0 %v1317
    %1351 = vmatprep.subr.mxu0 %v1320
    %1352 = vmatpush1.msra.mxu0 %v1319
    %1353 = vmatprep.subr.mxu0 %v1322
    %1354 = vmatpush1.msra.mxu0 %v1321
    %1355 = vmatprep.subr.mxu0 %v1324
    %1356 = vmatpush1.msra.mxu0 %v1323
    %1357 = vmatprep.subr.mxu0 %v1326
    %1358 = vmatpush1.msra.mxu0 %v1325
    %1359 = vmatprep.subr.mxu0 0.0
    %1360 = vmatpush1.msra.mxu0 0.0
    %1361 = vmatprep.subr.mxu0 0.0
    %1362 = vmatpush1.msra.mxu0 0.0
    %1363 = vmatprep.subr.mxu0 0.0
    %1364 = vmatpush1.msra.mxu0 0.0
    %1365 = vmatprep.subr.mxu0 0.0
    %1366 = vmatpush1.msra.mxu0 0.0
    %1367 = vmatprep.subr.mxu0 0.0
    %1368 = vmatpush1.msra.mxu0 0.0
    %1369 = vmatprep.subr.mxu0 0.0
    %1370 = vmatpush1.msra.mxu0 0.0
    %1371 = vmatprep.subr.mxu0 0.0
    %1372 = vmatpush1.msra.mxu0 0.0
    %1373 = vmatprep.subr.mxu0 0.0
    %1374 = vmatpush1.msra.mxu0 0.0
    %1375 = vmatprep.subr.mxu0 0.0
    %1376 = vmatpush1.msra.mxu0 0.0
    %1377 = vmatprep.subr.mxu0 0.0
    %1378 = vmatpush1.msra.mxu0 0.0
    %1379 = vmatprep.subr.mxu0 0.0
    %1380 = vmatpush1.msra.mxu0 0.0
    %1381 = vmatprep.subr.mxu0 0.0
    %1382 = vmatpush1.msra.mxu0 0.0
    %1383 = vmatprep.subr.mxu0 0.0
    %1384 = vmatpush1.msra.mxu0 0.0
    %1385 = vmatprep.subr.mxu0 0.0
    %1386 = vmatpush1.msra.mxu0 0.0
    %1387 = vmatprep.subr.mxu0 0.0
    %1388 = vmatpush1.msra.mxu0 0.0
    %1389 = vmatprep.subr.mxu0 0.0
    %1390 = vmatpush1.msra.mxu0 0.0
    %1391 = vmatprep.mubr.f32.mxu0 0.0
    %1392 = vmatmul.mubr.f32.gmra.mrb[0].mxu0 %v1282
    %v1393 = vpop.f32.mrb[0].mxu0
    %v1394 = vadd.f32 0.0, %v1393
    %v1395 = vpop.f32.mrb[0].mxu0
    %v1396 = vadd.f32 0.0, %v1395
    %1397 = vmatprep.mubr.f32.mxu0 0.0
    %1398 = vmatmul.mubr.f32.gmra.mrb[0].mxu0 %v1283
    %v1399 = vpop.f32.mrb[0].mxu0
    %v1400 = vadd.f32 0.0, %v1399
    %v1401 = vpop.f32.mrb[0].mxu0
    %v1402 = vadd.f32 0.0, %v1401
    %1403 = vmatprep.mubr.f32.mxu0 0.0
    %1404 = vmatmul.mubr.f32.gmra.mrb[0].mxu0 %v1284
    %v1405 = vpop.f32.mrb[0].mxu0
    %v1406 = vadd.f32 0.0, %v1405
    %v1407 = vpop.f32.mrb[0].mxu0
    %v1408 = vadd.f32 0.0, %v1407
    %1409 = vmatprep.mubr.f32.mxu0 0.0
    %1410 = vmatmul.mubr.f32.gmra.mrb[0].mxu0 %v1285
    %v1411 = vpop.f32.mrb[0].mxu0
    %v1412 = vadd.f32 0.0, %v1411
    %v1413 = vpop.f32.mrb[0].mxu0
    %v1414 = vadd.f32 0.0, %v1413
    %1415 = vmatprep.mubr.f32.mxu0 0.0
    %1416 = vmatmul.mubr.f32.gmra.mrb[0].mxu0 %v1286
    %v1417 = vpop.f32.mrb[0].mxu0
    %v1418 = vadd.f32 0.0, %v1417
    %v1419 = vpop.f32.mrb[0].mxu0
    %v1420 = vadd.f32 0.0, %v1419
    %1421 = vmatprep.mubr.f32.mxu0 0.0
    %1422 = vmatmul.mubr.f32.gmra.mrb[0].mxu0 %v1287
    %v1423 = vpop.f32.mrb[0].mxu0
    %v1424 = vadd.f32 0.0, %v1423
    %v1425 = vpop.f32.mrb[0].mxu0
    %v1426 = vadd.f32 0.0, %v1425
    %1427 = vmatprep.mubr.f32.mxu0 0.0
    %1428 = vmatmul.mubr.f32.gmra.mrb[0].mxu0 %v1288
    %v1429 = vpop.f32.mrb[0].mxu0
    %v1430 = vadd.f32 0.0, %v1429
    %v1431 = vpop.f32.mrb[0].mxu0
    %v1432 = vadd.f32 0.0, %v1431
    %1433 = vmatprep.mubr.f32.mxu0 0.0
    %1434 = vmatmul.mubr.f32.gmra.mrb[0].mxu0 %v1289
    %v1435 = vpop.f32.mrb[0].mxu0
    %v1436 = vadd.f32 0.0, %v1435
    %v1437 = vpop.f32.mrb[0].mxu0
    %v1438 = vadd.f32 0.0, %v1437
    %1439 = vmatprep.mubr.f32.mxu0 0.0
    %1440 = vmatmul.mubr.f32.gmra.mrb[0].mxu0 %v1290
    %v1441 = vpop.f32.mrb[0].mxu0
    %v1442 = vadd.f32 0.0, %v1441
    %v1443 = vpop.f32.mrb[0].mxu0
    %v1444 = vadd.f32 0.0, %v1443
    %1445 = vmatprep.mubr.f32.mxu0 0.0
    %1446 = vmatmul.mubr.f32.gmra.mrb[0].mxu0 %v1291
    %v1447 = vpop.f32.mrb[0].mxu0
    %v1448 = vadd.f32 0.0, %v1447
    %v1449 = vpop.f32.mrb[0].mxu0
    %v1450 = vadd.f32 0.0, %v1449
    %1451 = vmatprep.mubr.f32.mxu0 0.0
    %1452 = vmatmul.mubr.f32.gmra.mrb[0].mxu0 %v1292
    %v1453 = vpop.f32.mrb[0].mxu0
    %v1454 = vadd.f32 0.0, %v1453
    %v1455 = vpop.f32.mrb[0].mxu0
    %v1456 = vadd.f32 0.0, %v1455
    %1457 = vmatprep.mubr.f32.mxu0 0.0
    %1458 = vmatmul.mubr.f32.gmra.mrb[0].mxu0 %v1293
    %v1459 = vpop.f32.mrb[0].mxu0
    %v1460 = vadd.f32 0.0, %v1459
    %v1461 = vpop.f32.mrb[0].mxu0
    %v1462 = vadd.f32 0.0, %v1461
    %1463 = vdwg.mxu0
    %v1464 = vadd.f32 %v1188, %v1394
    %v1465 = vadd.f32 %v1190, %v1396
    %v1466 = vadd.f32 %v1194, %v1400
    %v1467 = vadd.f32 %v1196, %v1402
    %v1468 = vadd.f32 %v1200, %v1406
    %v1469 = vadd.f32 %v1202, %v1408
    %v1470 = vadd.f32 %v1206, %v1412
    %v1471 = vadd.f32 %v1208, %v1414
    %v1472 = vadd.f32 %v1212, %v1418
    %v1473 = vadd.f32 %v1214, %v1420
    %v1474 = vadd.f32 %v1218, %v1424
    %v1475 = vadd.f32 %v1220, %v1426
    %v1476 = vadd.f32 %v1224, %v1430
    %v1477 = vadd.f32 %v1226, %v1432
    %v1478 = vadd.f32 %v1230, %v1436
    %v1479 = vadd.f32 %v1232, %v1438
    %v1480 = vadd.f32 %v1236, %v1442
    %v1481 = vadd.f32 %v1238, %v1444
    %v1482 = vadd.f32 %v1242, %v1448
    %v1483 = vadd.f32 %v1244, %v1450
    %v1484 = vadd.f32 %v1248, %v1454
    %v1485 = vadd.f32 %v1250, %v1456
    %v1486 = vadd.f32 %v1254, %v1460
    %v1487 = vadd.f32 %v1256, %v1462
    %v1488 = vld [vmem:[%s4] sm:$0x3]
    %v1490 = vlaneseq
    %v1491 = vshrl.u32 %v1490, 7
    %v1492 = vsub.s32 0, %v1491
    %v1493 = vrot.slane %v1488, %v1492
    %v1494 = vlaneseq
    %v1495 = vshrl.u32 %v1494, 7
    %v1496 = vsub.s32 1, %v1495
    %v1497 = vrot.slane %v1488, %v1496
    %v1500 = vadd.f32 %v1464, %v1493
    %v1501 = vadd.f32 %v1465, %v1497
    %v1502 = vadd.f32 %v1466, %v1493
    %v1503 = vadd.f32 %v1467, %v1497
    %v1504 = vadd.f32 %v1468, %v1493
    %v1505 = vadd.f32 %v1469, %v1497
    %v1506 = vadd.f32 %v1470, %v1493
    %v1507 = vadd.f32 %v1471, %v1497
    %v1508 = vadd.f32 %v1472, %v1493
    %v1509 = vadd.f32 %v1473, %v1497
    %v1510 = vadd.f32 %v1474, %v1493
    %v1511 = vadd.f32 %v1475, %v1497
    %v1512 = vadd.f32 %v1476, %v1493
    %v1513 = vadd.f32 %v1477, %v1497
    %v1514 = vadd.f32 %v1478, %v1493
    %v1515 = vadd.f32 %v1479, %v1497
    %v1516 = vadd.f32 %v1480, %v1493
    %v1517 = vadd.f32 %v1481, %v1497
    %v1518 = vadd.f32 %v1482, %v1493
    %v1519 = vadd.f32 %v1483, %v1497
    %v1520 = vadd.f32 %v1484, %v1493
    %v1521 = vadd.f32 %v1485, %v1497
    %v1522 = vadd.f32 %v1486, %v1493
    %v1523 = vadd.f32 %v1487, %v1497
    %v1524 = vmax.f32 %v1500, 0.0
    %v1525 = vmax.f32 %v1501, 0.0
    %v1526 = vmax.f32 %v1502, 0.0
    %v1527 = vmax.f32 %v1503, 0.0
    %v1528 = vmax.f32 %v1504, 0.0
    %v1529 = vmax.f32 %v1505, 0.0
    %v1530 = vmax.f32 %v1506, 0.0
    %v1531 = vmax.f32 %v1507, 0.0
    %v1532 = vmax.f32 %v1508, 0.0
    %v1533 = vmax.f32 %v1509, 0.0
    %v1534 = vmax.f32 %v1510, 0.0
    %v1535 = vmax.f32 %v1511, 0.0
    %v1536 = vmax.f32 %v1512, 0.0
    %v1537 = vmax.f32 %v1513, 0.0
    %v1538 = vmax.f32 %v1514, 0.0
    %v1539 = vmax.f32 %v1515, 0.0
    %v1540 = vmax.f32 %v1516, 0.0
    %v1541 = vmax.f32 %v1517, 0.0
    %v1542 = vmax.f32 %v1518, 0.0
    %v1543 = vmax.f32 %v1519, 0.0
    %v1544 = vmax.f32 %v1520, 0.0
    %v1545 = vmax.f32 %v1521, 0.0
    %v1546 = vmax.f32 %v1522, 0.0
    %v1547 = vmax.f32 %v1523, 0.0
    %v1548 = vadd.f32 %v1524, %v1526
    %v1549 = vrot.slane %v1548, 4
    %v1550 = vadd.f32 %v1548, %v1549
    %v1551 = vrot.slane %v1550, 2
    %v1552 = vadd.f32 %v1550, %v1551
    %v1553 = vrot.slane %v1552, 1
    %v1554 = vadd.f32 %v1552, %v1553
    %v1555 = vadd.f32 %v1525, %v1527
    %v1556 = vrot.slane %v1555, 4
    %v1557 = vadd.f32 %v1555, %v1556
    %v1558 = vrot.slane %v1557, 2
    %v1559 = vadd.f32 %v1557, %v1558
    %v1560 = vrot.slane %v1559, 1
    %v1561 = vadd.f32 %v1559, %v1560
    %v1562 = vadd.f32 %v1528, %v1530
    %v1563 = vrot.slane %v1562, 4
    %v1564 = vadd.f32 %v1562, %v1563
    %v1565 = vrot.slane %v1564, 2
    %v1566 = vadd.f32 %v1564, %v1565
    %v1567 = vrot.slane %v1566, 1
    %v1568 = vadd.f32 %v1566, %v1567
    %v1569 = vadd.f32 %v1529, %v1531
    %v1570 = vrot.slane %v1569, 4
    %v1571 = vadd.f32 %v1569, %v1570
    %v1572 = vrot.slane %v1571, 2
    %v1573 = vadd.f32 %v1571, %v1572
    %v1574 = vrot.slane %v1573, 1
    %v1575 = vadd.f32 %v1573, %v1574
    %v1576 = vadd.f32 %v1532, %v1534
    %v1577 = vrot.slane %v1576, 4
    %v1578 = vadd.f32 %v1576, %v1577
    %v1579 = vrot.slane %v1578, 2
    %v1580 = vadd.f32 %v1578, %v1579
    %v1581 = vrot.slane %v1580, 1
    %v1582 = vadd.f32 %v1580, %v1581
    %v1583 = vadd.f32 %v1533, %v1535
    %v1584 = vrot.slane %v1583, 4
    %v1585 = vadd.f32 %v1583, %v1584
    %v1586 = vrot.slane %v1585, 2
    %v1587 = vadd.f32 %v1585, %v1586
    %v1588 = vrot.slane %v1587, 1
    %v1589 = vadd.f32 %v1587, %v1588
    %v1590 = vadd.f32 %v1536, %v1538
    %v1591 = vrot.slane %v1590, 4
    %v1592 = vadd.f32 %v1590, %v1591
    %v1593 = vrot.slane %v1592, 2
    %v1594 = vadd.f32 %v1592, %v1593
    %v1595 = vrot.slane %v1594, 1
    %v1596 = vadd.f32 %v1594, %v1595
    %v1597 = vadd.f32 %v1537, %v1539
    %v1598 = vrot.slane %v1597, 4
    %v1599 = vadd.f32 %v1597, %v1598
    %v1600 = vrot.slane %v1599, 2
    %v1601 = vadd.f32 %v1599, %v1600
    %v1602 = vrot.slane %v1601, 1
    %v1603 = vadd.f32 %v1601, %v1602
    %v1604 = vadd.f32 %v1540, %v1542
    %v1605 = vrot.slane %v1604, 4
    %v1606 = vadd.f32 %v1604, %v1605
    %v1607 = vrot.slane %v1606, 2
    %v1608 = vadd.f32 %v1606, %v1607
    %v1609 = vrot.slane %v1608, 1
    %v1610 = vadd.f32 %v1608, %v1609
    %v1611 = vadd.f32 %v1541, %v1543
    %v1612 = vrot.slane %v1611, 4
    %v1613 = vadd.f32 %v1611, %v1612
    %v1614 = vrot.slane %v1613, 2
    %v1615 = vadd.f32 %v1613, %v1614
    %v1616 = vrot.slane %v1615, 1
    %v1617 = vadd.f32 %v1615, %v1616
    %v1618 = vadd.f32 %v1544, %v1546
    %v1619 = vrot.slane %v1618, 4
    %v1620 = vadd.f32 %v1618, %v1619
    %v1621 = vrot.slane %v1620, 2
    %v1622 = vadd.f32 %v1620, %v1621
    %v1623 = vrot.slane %v1622, 1
    %v1624 = vadd.f32 %v1622, %v1623
    %v1625 = vadd.f32 %v1545, %v1547
    %v1626 = vrot.slane %v1625, 4
    %v1627 = vadd.f32 %v1625, %v1626
    %v1628 = vrot.slane %v1627, 2
    %v1629 = vadd.f32 %v1627, %v1628
    %v1630 = vrot.slane %v1629, 1
    %v1631 = vadd.f32 %v1629, %v1630
    %v1632 = vld [vmem:[%s6] sm:$0x1]
    %v1633 = vld [vmem:[%s5] sm:$0xff]
    %v1634 = vld [vmem:[%s5 + $0x8] sm:$0xff]
    %v1635 = vld [vmem:[%s5 + $0x10] sm:$0xff]
    %v1636 = vld [vmem:[%s5 + $0x18] sm:$0xff]
    %v1637 = vld [vmem:[%s5 + $0x20] sm:$0xff]
    %v1638 = vld [vmem:[%s5 + $0x28] sm:$0xff]
    %v1639 = vld [vmem:[%s5 + $0x30] sm:$0xff]
    %v1640 = vld [vmem:[%s5 + $0x38] sm:$0xff]
    %v1641 = vld [vmem:[%s5 + $0x40] sm:$0xff]
    %v1642 = vld [vmem:[%s5 + $0x48] sm:$0xff]
    %v1643 = vld [vmem:[%s5 + $0x50] sm:$0xff]
    %v1644 = vld [vmem:[%s5 + $0x58] sm:$0xff]
    %v1645 = vld [vmem:[%s5 + $0x60] sm:$0xff]
    %v1646 = vld [vmem:[%s5 + $0x68] sm:$0xff]
    %v1647 = vld [vmem:[%s5 + $0x70] sm:$0xff]
    %v1648 = vld [vmem:[%s5 + $0x78] sm:$0xff]
    %v1649 = vld [vmem:[%s5 + $0x80] sm:$0xff]
    %v1650 = vld [vmem:[%s5 + $0x88] sm:$0xff]
    %v1651 = vld [vmem:[%s5 + $0x90] sm:$0xff]
    %v1652 = vld [vmem:[%s5 + $0x98] sm:$0xff]
    %v1653 = vld [vmem:[%s5 + $0xa0] sm:$0xff]
    %v1654 = vld [vmem:[%s5 + $0xa8] sm:$0xff]
    %v1655 = vld [vmem:[%s5 + $0xb0] sm:$0xff]
    %v1656 = vld [vmem:[%s5 + $0xb8] sm:$0xff]
    %v1657 = vld [vmem:[%s5 + $0xc0] sm:$0xff]
    %v1658 = vld [vmem:[%s5 + $0xc8] sm:$0xff]
    %v1659 = vld [vmem:[%s5 + $0xd0] sm:$0xff]
    %v1660 = vld [vmem:[%s5 + $0xd8] sm:$0xff]
    %v1661 = vld [vmem:[%s5 + $0xe0] sm:$0xff]
    %v1662 = vld [vmem:[%s5 + $0xe8] sm:$0xff]
    %v1663 = vld [vmem:[%s5 + $0xf0] sm:$0xff]
    %v1664 = vld [vmem:[%s5 + $0xf8] sm:$0xff]
    %vm1669 = vcmask 1041409
    %v1670 = vsel %vm1669, %v1568, %v1554
    %v1671 = vsel %vm1669, %v1575, %v1561
    %1674 = vmatprep.subr.mxu0 0.0
    %1675 = vmatpush1.msra.mxu0 %v1633
    %1676 = vmatprep.subr.mxu0 0.0
    %1677 = vmatpush1.msra.mxu0 %v1634
    %1678 = vmatprep.subr.mxu0 0.0
    %1679 = vmatpush1.msra.mxu0 %v1635
    %1680 = vmatprep.subr.mxu0 0.0
    %1681 = vmatpush1.msra.mxu0 %v1636
    %1682 = vmatprep.subr.mxu0 0.0
    %1683 = vmatpush1.msra.mxu0 %v1637
    %1684 = vmatprep.subr.mxu0 0.0
    %1685 = vmatpush1.msra.mxu0 %v1638
    %1686 = vmatprep.subr.mxu0 0.0
    %1687 = vmatpush1.msra.mxu0 %v1639
    %1688 = vmatprep.subr.mxu0 0.0
    %1689 = vmatpush1.msra.mxu0 %v1640
    %1690 = vmatprep.subr.mxu0 0.0
    %1691 = vmatpush1.msra.mxu0 %v1641
    %1692 = vmatprep.subr.mxu0 0.0
    %1693 = vmatpush1.msra.mxu0 %v1642
    %1694 = vmatprep.subr.mxu0 0.0
    %1695 = vmatpush1.msra.mxu0 %v1643
    %1696 = vmatprep.subr.mxu0 0.0
    %1697 = vmatpush1.msra.mxu0 %v1644
    %1698 = vmatprep.subr.mxu0 0.0
    %1699 = vmatpush1.msra.mxu0 %v1645
    %1700 = vmatprep.subr.mxu0 0.0
    %1701 = vmatpush1.msra.mxu0 %v1646
    %1702 = vmatprep.subr.mxu0 0.0
    %1703 = vmatpush1.msra.mxu0 %v1647
    %1704 = vmatprep.subr.mxu0 0.0
    %1705 = vmatpush1.msra.mxu0 %v1648
    %1706 = vmatprep.subr.mxu0 0.0
    %1707 = vmatpush1.msra.mxu0 %v1649
    %1708 = vmatprep.subr.mxu0 0.0
    %1709 = vmatpush1.msra.mxu0 %v1650
    %1710 = vmatprep.subr.mxu0 0.0
    %1711 = vmatpush1.msra.mxu0 %v1651
    %1712 = vmatprep.subr.mxu0 0.0
    %1713 = vmatpush1.msra.mxu0 %v1652
    %1714 = vmatprep.subr.mxu0 0.0
    %1715 = vmatpush1.msra.mxu0 %v1653
    %1716 = vmatprep.subr.mxu0 0.0
    %1717 = vmatpush1.msra.mxu0 %v1654
    %1718 = vmatprep.subr.mxu0 0.0
    %1719 = vmatpush1.msra.mxu0 %v1655
    %1720 = vmatprep.subr.mxu0 0.0
    %1721 = vmatpush1.msra.mxu0 %v1656
    %1722 = vmatprep.subr.mxu0 0.0
    %1723 = vmatpush1.msra.mxu0 %v1657
    %1724 = vmatprep.subr.mxu0 0.0
    %1725 = vmatpush1.msra.mxu0 %v1658
    %1726 = vmatprep.subr.mxu0 0.0
    %1727 = vmatpush1.msra.mxu0 %v1659
    %1728 = vmatprep.subr.mxu0 0.0
    %1729 = vmatpush1.msra.mxu0 %v1660
    %1730 = vmatprep.subr.mxu0 0.0
    %1731 = vmatpush1.msra.mxu0 %v1661
    %1732 = vmatprep.subr.mxu0 0.0
    %1733 = vmatpush1.msra.mxu0 %v1662
    %1734 = vmatprep.subr.mxu0 0.0
    %1735 = vmatpush1.msra.mxu0 %v1663
    %1736 = vmatprep.subr.mxu0 0.0
    %1737 = vmatpush1.msra.mxu0 %v1664
    %1738 = vmatprep.mubr.f32.mxu0 %v1671
    %1739 = vmatmul.mubr.f32.gmra.mrb[0].mxu0 %v1670
    %v1740 = vpop.f32.mrb[0].mxu0
    %v1741 = vadd.f32 0.0, %v1740
    %v1742 = vpop.f32.mrb[0].mxu0
    %1743 = vdwg.mxu0
    %v1745 = vlaneseq
    %v1746 = vshrl.u32 %v1745, 7
    %v1747 = vsub.s32 0, %v1746
    %v1748 = vrot.slane %v1632, %v1747
    %v1750 = vadd.f32 %v1748, %v1741
    %s1751 = scalar_lea.vmem %s5, 256
    %v1752 = vld [vmem:[%s1751] sm:$0xff]
    %v1753 = vld [vmem:[%s1751 + $0x8] sm:$0xff]
    %v1754 = vld [vmem:[%s1751 + $0x10] sm:$0xff]
    %v1755 = vld [vmem:[%s1751 + $0x18] sm:$0xff]
    %v1756 = vld [vmem:[%s1751 + $0x20] sm:$0xff]
    %v1757 = vld [vmem:[%s1751 + $0x28] sm:$0xff]
    %v1758 = vld [vmem:[%s1751 + $0x30] sm:$0xff]
    %v1759 = vld [vmem:[%s1751 + $0x38] sm:$0xff]
    %v1760 = vld [vmem:[%s1751 + $0x40] sm:$0xff]
    %v1761 = vld [vmem:[%s1751 + $0x48] sm:$0xff]
    %v1762 = vld [vmem:[%s1751 + $0x50] sm:$0xff]
    %v1763 = vld [vmem:[%s1751 + $0x58] sm:$0xff]
    %v1764 = vld [vmem:[%s1751 + $0x60] sm:$0xff]
    %v1765 = vld [vmem:[%s1751 + $0x68] sm:$0xff]
    %v1766 = vld [vmem:[%s1751 + $0x70] sm:$0xff]
    %v1767 = vld [vmem:[%s1751 + $0x78] sm:$0xff]
    %v1768 = vld [vmem:[%s1751 + $0x80] sm:$0xff]
    %v1769 = vld [vmem:[%s1751 + $0x88] sm:$0xff]
    %v1770 = vld [vmem:[%s1751 + $0x90] sm:$0xff]
    %v1771 = vld [vmem:[%s1751 + $0x98] sm:$0xff]
    %v1772 = vld [vmem:[%s1751 + $0xa0] sm:$0xff]
    %v1773 = vld [vmem:[%s1751 + $0xa8] sm:$0xff]
    %v1774 = vld [vmem:[%s1751 + $0xb0] sm:$0xff]
    %v1775 = vld [vmem:[%s1751 + $0xb8] sm:$0xff]
    %v1776 = vld [vmem:[%s1751 + $0xc0] sm:$0xff]
    %v1777 = vld [vmem:[%s1751 + $0xc8] sm:$0xff]
    %v1778 = vld [vmem:[%s1751 + $0xd0] sm:$0xff]
    %v1779 = vld [vmem:[%s1751 + $0xd8] sm:$0xff]
    %v1780 = vld [vmem:[%s1751 + $0xe0] sm:$0xff]
    %v1781 = vld [vmem:[%s1751 + $0xe8] sm:$0xff]
    %v1782 = vld [vmem:[%s1751 + $0xf0] sm:$0xff]
    %v1783 = vld [vmem:[%s1751 + $0xf8] sm:$0xff]
    %v1788 = vsel %vm1669, %v1596, %v1582
    %v1789 = vsel %vm1669, %v1603, %v1589
    %1792 = vmatprep.subr.mxu0 0.0
    %1793 = vmatpush1.msra.mxu0 %v1752
    %1794 = vmatprep.subr.mxu0 0.0
    %1795 = vmatpush1.msra.mxu0 %v1753
    %1796 = vmatprep.subr.mxu0 0.0
    %1797 = vmatpush1.msra.mxu0 %v1754
    %1798 = vmatprep.subr.mxu0 0.0
    %1799 = vmatpush1.msra.mxu0 %v1755
    %1800 = vmatprep.subr.mxu0 0.0
    %1801 = vmatpush1.msra.mxu0 %v1756
    %1802 = vmatprep.subr.mxu0 0.0
    %1803 = vmatpush1.msra.mxu0 %v1757
    %1804 = vmatprep.subr.mxu0 0.0
    %1805 = vmatpush1.msra.mxu0 %v1758
    %1806 = vmatprep.subr.mxu0 0.0
    %1807 = vmatpush1.msra.mxu0 %v1759
    %1808 = vmatprep.subr.mxu0 0.0
    %1809 = vmatpush1.msra.mxu0 %v1760
    %1810 = vmatprep.subr.mxu0 0.0
    %1811 = vmatpush1.msra.mxu0 %v1761
    %1812 = vmatprep.subr.mxu0 0.0
    %1813 = vmatpush1.msra.mxu0 %v1762
    %1814 = vmatprep.subr.mxu0 0.0
    %1815 = vmatpush1.msra.mxu0 %v1763
    %1816 = vmatprep.subr.mxu0 0.0
    %1817 = vmatpush1.msra.mxu0 %v1764
    %1818 = vmatprep.subr.mxu0 0.0
    %1819 = vmatpush1.msra.mxu0 %v1765
    %1820 = vmatprep.subr.mxu0 0.0
    %1821 = vmatpush1.msra.mxu0 %v1766
    %1822 = vmatprep.subr.mxu0 0.0
    %1823 = vmatpush1.msra.mxu0 %v1767
    %1824 = vmatprep.subr.mxu0 0.0
    %1825 = vmatpush1.msra.mxu0 %v1768
    %1826 = vmatprep.subr.mxu0 0.0
    %1827 = vmatpush1.msra.mxu0 %v1769
    %1828 = vmatprep.subr.mxu0 0.0
    %1829 = vmatpush1.msra.mxu0 %v1770
    %1830 = vmatprep.subr.mxu0 0.0
    %1831 = vmatpush1.msra.mxu0 %v1771
    %1832 = vmatprep.subr.mxu0 0.0
    %1833 = vmatpush1.msra.mxu0 %v1772
    %1834 = vmatprep.subr.mxu0 0.0
    %1835 = vmatpush1.msra.mxu0 %v1773
    %1836 = vmatprep.subr.mxu0 0.0
    %1837 = vmatpush1.msra.mxu0 %v1774
    %1838 = vmatprep.subr.mxu0 0.0
    %1839 = vmatpush1.msra.mxu0 %v1775
    %1840 = vmatprep.subr.mxu0 0.0
    %1841 = vmatpush1.msra.mxu0 %v1776
    %1842 = vmatprep.subr.mxu0 0.0
    %1843 = vmatpush1.msra.mxu0 %v1777
    %1844 = vmatprep.subr.mxu0 0.0
    %1845 = vmatpush1.msra.mxu0 %v1778
    %1846 = vmatprep.subr.mxu0 0.0
    %1847 = vmatpush1.msra.mxu0 %v1779
    %1848 = vmatprep.subr.mxu0 0.0
    %1849 = vmatpush1.msra.mxu0 %v1780
    %1850 = vmatprep.subr.mxu0 0.0
    %1851 = vmatpush1.msra.mxu0 %v1781
    %1852 = vmatprep.subr.mxu0 0.0
    %1853 = vmatpush1.msra.mxu0 %v1782
    %1854 = vmatprep.subr.mxu0 0.0
    %1855 = vmatpush1.msra.mxu0 %v1783
    %1856 = vmatprep.mubr.f32.mxu0 %v1789
    %1857 = vmatmul.mubr.f32.gmra.mrb[0].mxu0 %v1788
    %v1858 = vpop.f32.mrb[0].mxu0
    %v1859 = vadd.f32 0.0, %v1858
    %v1860 = vpop.f32.mrb[0].mxu0
    %1861 = vdwg.mxu0
    %v1862 = vadd.f32 %v1750, %v1859
    %s1863 = scalar_lea.vmem %s5, 512
    %v1864 = vld [vmem:[%s1863] sm:$0xff]
    %v1865 = vld [vmem:[%s1863 + $0x8] sm:$0xff]
    %v1866 = vld [vmem:[%s1863 + $0x10] sm:$0xff]
    %v1867 = vld [vmem:[%s1863 + $0x18] sm:$0xff]
    %v1868 = vld [vmem:[%s1863 + $0x20] sm:$0xff]
    %v1869 = vld [vmem:[%s1863 + $0x28] sm:$0xff]
    %v1870 = vld [vmem:[%s1863 + $0x30] sm:$0xff]
    %v1871 = vld [vmem:[%s1863 + $0x38] sm:$0xff]
    %v1872 = vld [vmem:[%s1863 + $0x40] sm:$0xff]
    %v1873 = vld [vmem:[%s1863 + $0x48] sm:$0xff]
    %v1874 = vld [vmem:[%s1863 + $0x50] sm:$0xff]
    %v1875 = vld [vmem:[%s1863 + $0x58] sm:$0xff]
    %v1876 = vld [vmem:[%s1863 + $0x60] sm:$0xff]
    %v1877 = vld [vmem:[%s1863 + $0x68] sm:$0xff]
    %v1878 = vld [vmem:[%s1863 + $0x70] sm:$0xff]
    %v1879 = vld [vmem:[%s1863 + $0x78] sm:$0xff]
    %v1880 = vld [vmem:[%s1863 + $0x80] sm:$0xff]
    %v1881 = vld [vmem:[%s1863 + $0x88] sm:$0xff]
    %v1882 = vld [vmem:[%s1863 + $0x90] sm:$0xff]
    %v1883 = vld [vmem:[%s1863 + $0x98] sm:$0xff]
    %v1884 = vld [vmem:[%s1863 + $0xa0] sm:$0xff]
    %v1885 = vld [vmem:[%s1863 + $0xa8] sm:$0xff]
    %v1886 = vld [vmem:[%s1863 + $0xb0] sm:$0xff]
    %v1887 = vld [vmem:[%s1863 + $0xb8] sm:$0xff]
    %v1888 = vld [vmem:[%s1863 + $0xc0] sm:$0xff]
    %v1889 = vld [vmem:[%s1863 + $0xc8] sm:$0xff]
    %v1890 = vld [vmem:[%s1863 + $0xd0] sm:$0xff]
    %v1891 = vld [vmem:[%s1863 + $0xd8] sm:$0xff]
    %v1892 = vld [vmem:[%s1863 + $0xe0] sm:$0xff]
    %v1893 = vld [vmem:[%s1863 + $0xe8] sm:$0xff]
    %v1894 = vld [vmem:[%s1863 + $0xf0] sm:$0xff]
    %v1895 = vld [vmem:[%s1863 + $0xf8] sm:$0xff]
    %v1900 = vsel %vm1669, %v1624, %v1610
    %v1901 = vsel %vm1669, %v1631, %v1617
    %1904 = vmatprep.subr.mxu0 0.0
    %1905 = vmatpush1.msra.mxu0 %v1864
    %1906 = vmatprep.subr.mxu0 0.0
    %1907 = vmatpush1.msra.mxu0 %v1865
    %1908 = vmatprep.subr.mxu0 0.0
    %1909 = vmatpush1.msra.mxu0 %v1866
    %1910 = vmatprep.subr.mxu0 0.0
    %1911 = vmatpush1.msra.mxu0 %v1867
    %1912 = vmatprep.subr.mxu0 0.0
    %1913 = vmatpush1.msra.mxu0 %v1868
    %1914 = vmatprep.subr.mxu0 0.0
    %1915 = vmatpush1.msra.mxu0 %v1869
    %1916 = vmatprep.subr.mxu0 0.0
    %1917 = vmatpush1.msra.mxu0 %v1870
    %1918 = vmatprep.subr.mxu0 0.0
    %1919 = vmatpush1.msra.mxu0 %v1871
    %1920 = vmatprep.subr.mxu0 0.0
    %1921 = vmatpush1.msra.mxu0 %v1872
    %1922 = vmatprep.subr.mxu0 0.0
    %1923 = vmatpush1.msra.mxu0 %v1873
    %1924 = vmatprep.subr.mxu0 0.0
    %1925 = vmatpush1.msra.mxu0 %v1874
    %1926 = vmatprep.subr.mxu0 0.0
    %1927 = vmatpush1.msra.mxu0 %v1875
    %1928 = vmatprep.subr.mxu0 0.0
    %1929 = vmatpush1.msra.mxu0 %v1876
    %1930 = vmatprep.subr.mxu0 0.0
    %1931 = vmatpush1.msra.mxu0 %v1877
    %1932 = vmatprep.subr.mxu0 0.0
    %1933 = vmatpush1.msra.mxu0 %v1878
    %1934 = vmatprep.subr.mxu0 0.0
    %1935 = vmatpush1.msra.mxu0 %v1879
    %1936 = vmatprep.subr.mxu0 0.0
    %1937 = vmatpush1.msra.mxu0 %v1880
    %1938 = vmatprep.subr.mxu0 0.0
    %1939 = vmatpush1.msra.mxu0 %v1881
    %1940 = vmatprep.subr.mxu0 0.0
    %1941 = vmatpush1.msra.mxu0 %v1882
    %1942 = vmatprep.subr.mxu0 0.0
    %1943 = vmatpush1.msra.mxu0 %v1883
    %1944 = vmatprep.subr.mxu0 0.0
    %1945 = vmatpush1.msra.mxu0 %v1884
    %1946 = vmatprep.subr.mxu0 0.0
    %1947 = vmatpush1.msra.mxu0 %v1885
    %1948 = vmatprep.subr.mxu0 0.0
    %1949 = vmatpush1.msra.mxu0 %v1886
    %1950 = vmatprep.subr.mxu0 0.0
    %1951 = vmatpush1.msra.mxu0 %v1887
    %1952 = vmatprep.subr.mxu0 0.0
    %1953 = vmatpush1.msra.mxu0 %v1888
    %1954 = vmatprep.subr.mxu0 0.0
    %1955 = vmatpush1.msra.mxu0 %v1889
    %1956 = vmatprep.subr.mxu0 0.0
    %1957 = vmatpush1.msra.mxu0 %v1890
    %1958 = vmatprep.subr.mxu0 0.0
    %1959 = vmatpush1.msra.mxu0 %v1891
    %1960 = vmatprep.subr.mxu0 0.0
    %1961 = vmatpush1.msra.mxu0 %v1892
    %1962 = vmatprep.subr.mxu0 0.0
    %1963 = vmatpush1.msra.mxu0 %v1893
    %1964 = vmatprep.subr.mxu0 0.0
    %1965 = vmatpush1.msra.mxu0 %v1894
    %1966 = vmatprep.subr.mxu0 0.0
    %1967 = vmatpush1.msra.mxu0 %v1895
    %1968 = vmatprep.mubr.f32.mxu0 %v1901
    %1969 = vmatmul.mubr.f32.gmra.mrb[0].mxu0 %v1900
    %v1970 = vpop.f32.mrb[0].mxu0
    %v1971 = vadd.f32 0.0, %v1970
    %v1972 = vpop.f32.mrb[0].mxu0
    %1973 = vdwg.mxu0
    %v1974 = vadd.f32 %v1862, %v1971
    %v1975 = vmax.f32 %v1974, 0.0
    %v1976 = vld [vmem:[%s7] sm:$0xff]
    %v1977 = vld [vmem:[%s7 + $0x8] sm:$0xff]
    %v1978 = vld [vmem:[%s7 + $0x10] sm:$0xff]
    %v1979 = vld [vmem:[%s7 + $0x18] sm:$0xff]
    %v1980 = vld [vmem:[%s8] sm:$0x1]
    %v1982 = vlaneseq
    %v1983 = vshrl.u32 %v1982, 7
    %v1984 = vsub.s32 0, %v1983
    %v1985 = vrot.slane %v1980, %v1984
    %vm1987 = vcmask 261120
    %v1989 = vsel %vm1987, %v1975, 0
    %1991 = vmatprep.subr.mxu0 0.0
    %1992 = vmatpush1.msra.mxu0 %v1976
    %1993 = vmatprep.subr.mxu0 0.0
    %1994 = vmatpush1.msra.mxu0 %v1977
    %1995 = vmatprep.subr.mxu0 0.0
    %1996 = vmatpush1.msra.mxu0 %v1978
    %1997 = vmatprep.subr.mxu0 0.0
    %1998 = vmatpush1.msra.mxu0 %v1979
    %1999 = vmatprep.subr.mxu0 0.0
    %2000 = vmatpush1.msra.mxu0 0.0
    %2001 = vmatprep.subr.mxu0 0.0
    %2002 = vmatpush1.msra.mxu0 0.0
    %2003 = vmatprep.subr.mxu0 0.0
    %2004 = vmatpush1.msra.mxu0 0.0
    %2005 = vmatprep.subr.mxu0 0.0
    %2006 = vmatpush1.msra.mxu0 0.0
    %2007 = vmatprep.subr.mxu0 0.0
    %2008 = vmatpush1.msra.mxu0 0.0
    %2009 = vmatprep.subr.mxu0 0.0
    %2010 = vmatpush1.msra.mxu0 0.0
    %2011 = vmatprep.subr.mxu0 0.0
    %2012 = vmatpush1.msra.mxu0 0.0
    %2013 = vmatprep.subr.mxu0 0.0
    %2014 = vmatpush1.msra.mxu0 0.0
    %2015 = vmatprep.subr.mxu0 0.0
    %2016 = vmatpush1.msra.mxu0 0.0
    %2017 = vmatprep.subr.mxu0 0.0
    %2018 = vmatpush1.msra.mxu0 0.0
    %2019 = vmatprep.subr.mxu0 0.0
    %2020 = vmatpush1.msra.mxu0 0.0
    %2021 = vmatprep.subr.mxu0 0.0
    %2022 = vmatpush1.msra.mxu0 0.0
    %2023 = vmatprep.subr.mxu0 0.0
    %2024 = vmatpush1.msra.mxu0 0.0
    %2025 = vmatprep.subr.mxu0 0.0
    %2026 = vmatpush1.msra.mxu0 0.0
    %2027 = vmatprep.subr.mxu0 0.0
    %2028 = vmatpush1.msra.mxu0 0.0
    %2029 = vmatprep.subr.mxu0 0.0
    %2030 = vmatpush1.msra.mxu0 0.0
    %2031 = vmatprep.subr.mxu0 0.0
    %2032 = vmatpush1.msra.mxu0 0.0
    %2033 = vmatprep.subr.mxu0 0.0
    %2034 = vmatpush1.msra.mxu0 0.0
    %2035 = vmatprep.subr.mxu0 0.0
    %2036 = vmatpush1.msra.mxu0 0.0
    %2037 = vmatprep.subr.mxu0 0.0
    %2038 = vmatpush1.msra.mxu0 0.0
    %2039 = vmatprep.subr.mxu0 0.0
    %2040 = vmatpush1.msra.mxu0 0.0
    %2041 = vmatprep.subr.mxu0 0.0
    %2042 = vmatpush1.msra.mxu0 0.0
    %2043 = vmatprep.subr.mxu0 0.0
    %2044 = vmatpush1.msra.mxu0 0.0
    %2045 = vmatprep.subr.mxu0 0.0
    %2046 = vmatpush1.msra.mxu0 0.0
    %2047 = vmatprep.subr.mxu0 0.0
    %2048 = vmatpush1.msra.mxu0 0.0
    %2049 = vmatprep.subr.mxu0 0.0
    %2050 = vmatpush1.msra.mxu0 0.0
    %2051 = vmatprep.subr.mxu0 0.0
    %2052 = vmatpush1.msra.mxu0 0.0
    %2053 = vmatprep.subr.mxu0 0.0
    %2054 = vmatpush1.msra.mxu0 0.0
    %2055 = vmatprep.mubr.f32.mxu0 0.0
    %2056 = vmatmul.mubr.f32.gmra.mrb[0].mxu0 %v1989
    %v2057 = vpop.f32.mrb[0].mxu0
    %v2058 = vadd.f32 %v1985, %v2057
    %v2059 = vpop.f32.mrb[0].mxu0
    %2060 = vdwg.mxu0
    %vm2061 = vcmask 508928
    %2062 = vst.msk [vmem:[#allocation2] sm:$0x3] %vm2061, %v2058
    // Predicated region
    $region38: #{multiview_hand_pose_cnn.1} parent=1 // pred_check
      _
    $region39: #{multiview_hand_pose_cnn.1} parent=1 // pred_check_branch
      %2064 = sbr.rel (0) target = $region41
    $region40: #{multiview_hand_pose_cnn.1} parent=1 // pred_region
      %s2066 = ssub.s32 32, 32
      %2067 = vsyncadd [#allocation3], %s2066
      %s2069 = sshll.u32 [#allocation2], 4
      %s2070 = int_to_ptr.vmem [resolvable:$true] %s2069
      %2072 = dma.vmem_to_hbm [thread:$0]  %s2070, 32, %s9, [#allocation3]
    $region41: #{multiview_hand_pose_cnn.1} parent=1 // pred_fallthru
      _
    // Predicated region
    $region42: #{multiview_hand_pose_cnn.1} parent=1 // pred_check
      _
    $region43: #{multiview_hand_pose_cnn.1} parent=1 // pred_check_branch
      %2074 = sbr.rel (0) target = $region45
    $region44: #{multiview_hand_pose_cnn.1} parent=1 // pred_region
      %2075 = dma.done [#allocation3], 32
    $region45: #{multiview_hand_pose_cnn.1} parent=1 // pred_fallthru
      _
    %2076 = vsyncpa [#allocation3], 1

</llo_original>
